<compile_context>
chip_gen: v5e
topology: v5e:2x2
jax: 0.10.0
libtpu: 0.0.40
codegen_flags: <defaults>
</compile_context>

<pallas_src>
import functools

import jax
import jax.numpy as jnp
import numpy as np
from jax import lax
from jax.experimental import pallas as pl
from jax.experimental.pallas import tpu as pltpu

_LN_EPS = 1e-5  # torch.nn.LayerNorm default


def _round_up(v, m):
    return (v + m - 1) // m * m


# ----------------------------- Pallas kernel -------------------------------


def _gru2d_diag_kernel(ig_ref, md_ref, ws_ref, lns_ref, lnh_ref,
                       out_ref, sbuf_ref, *, B, H, K):
    """One grid step = K anti-diagonals of the 2D-GRU wavefront.

    sbuf holds the current state-grid diagonal: sbuf[m*B + b] = states[m, m+o]
    (flipped frame), m = 0..T0.  Cell slot i (i = 0..T0-1; off-diagonal / padded
    slots have mask == 0) reads sbuf blocks i (s_prev1) and i+1 (s_prev0) and
    writes block i+1 of the next diagonal; block 0 of every diagonal stays zero.
    """
    R = ig_ref.shape[1]          # = T0 * B cell rows per diagonal
    step = pl.program_id(0)

    @pl.when(step == 0)
    def _init():
        sbuf_ref[...] = jnp.zeros_like(sbuf_ref)      # zero-initialized state grid

    lns_g, lns_b = lns_ref[0:1, :], lns_ref[1:2, :]
    lnh_g, lnh_b = lnh_ref[0:1, :], lnh_ref[1:2, :]

    def layer_norm(v, g, b, inv_n):
        mu = jnp.sum(v, axis=-1, keepdims=True) * inv_n
        ex2 = jnp.sum(v * v, axis=-1, keepdims=True) * inv_n
        return (v - mu) * lax.rsqrt(ex2 - mu * mu + _LN_EPS) * g + b

    # K is a small static constant -> fully unrolled; ig/out indices are static.
    for d in range(K):
        ig = ig_ref[d]                                # (R, 4H) precomputed LNi(x@Wi)
        msk = md_ref[step * K + d]                    # (R, 1)  resident mask
        s0 = sbuf_ref[B:R + B, :]                     # s_prev0[i] = states[i+1, j+1]
        s1 = sbuf_ref[0:R, :]                         # s_prev1[i] = states[i,   j]
        # fused state matmul: cat([s_prev0, s_prev1], -1) @ [Ws0; Ws1]
        sg = layer_norm(
            jnp.dot(jnp.concatenate([s0, s1], axis=-1), ws_ref[...],
                    preferred_element_type=jnp.float32),
            lns_g, lns_b, 1.0 / (4 * H))
        gt = ig + sg
        r_inv = jax.nn.sigmoid(gt[:, 0 * H:1 * H])
        i_g = jax.nn.sigmoid(gt[:, 1 * H:2 * H])
        l_g = jax.nn.sigmoid(gt[:, 3 * H:4 * H])
        n = jnp.tanh(gt[:, 2 * H:3 * H] - r_inv * sg[:, 2 * H:3 * H])
        h = n + i_g * (l_g * s0 + (1.0 - l_g) * s1 - n)
        h = layer_norm(h, lnh_g, lnh_b, 1.0 / H) * msk
        # next wavefront: block 0 stays zero (set once at step 0), blocks 1..T0 <- h
        sbuf_ref[B:, :] = h
        out_ref[d] = h


# ------------------------------ JAX wrapper ---------------------------------


def _diagonalize(ig, masks, nd_pad):
    """(B,T0,T1,C) -> diagonal-major (nd_pad, T0*B, C) + (nd_pad, T0*B, 1) mask.

    Slot i of diagonal t holds original cell (i, t-i) (flipped-frame cell
    (i, i + T1-1-t)); invalid / padded slots get zero values and zero mask.
    """
    B, T0, T1, C = ig.shape
    Nd = T0 + T1 - 1
    tt = jnp.arange(Nd)[:, None]                     # (Nd, 1)
    ii = jnp.arange(T0)[None, :]                     # (1, T0)
    jj = tt - ii                                     # original T1 index
    valid = (jj >= 0) & (jj < T1)
    jjc = jnp.clip(jj, 0, T1 - 1)
    iib = jnp.broadcast_to(ii, (Nd, T0))

    g = jnp.where(valid[None, :, :, None], ig[:, iib, jjc, :], 0.0)   # (B,Nd,T0,C)
    gd = jnp.transpose(g, (1, 2, 0, 3)).reshape(Nd, T0 * B, C)
    m = jnp.where(valid[None], masks.astype(jnp.float32)[:, iib, jjc], 0.0)
    md = jnp.transpose(m, (1, 2, 0)).reshape(Nd, T0 * B, 1)
    pad = nd_pad - Nd
    if pad:
        gd = jnp.pad(gd, ((0, pad), (0, 0), (0, 0)))
        md = jnp.pad(md, ((0, pad), (0, 0), (0, 0)))
    return gd, md


@jax.jit
def gru2d_layer(x, masks, params):
    """Returns (states_s, states) exactly as GRU2dLayer.forward (layer_norm=True)."""
    B, T0, T1, E = x.shape
    H = params["lnh_g"].shape[-1]
    Nd = T0 + T1 - 1
    K = min(4, Nd)                       # diagonals per sequential grid step
    Nd_pad = _round_up(Nd, K)
    R = T0 * B                           # cell rows per diagonal
    S = (T0 + 1) * B                     # wavefront state rows

    # ---- hoisted state-independent input path: one big matmul + LNi (off-chain)
    ig = jnp.dot(x.reshape(B * T0 * T1, E), params["wi"],
                 preferred_element_type=jnp.float32)
    mu = jnp.mean(ig, -1, keepdims=True)
    var = jnp.mean((ig - mu) ** 2, -1, keepdims=True)
    ig = (ig - mu) * lax.rsqrt(var + _LN_EPS) * params["lni_g"] + params["lni_b"]
    ig = ig.reshape(B, T0, T1, 4 * H)

    igd, md = _diagonalize(ig, masks, Nd_pad)

    ws = jnp.concatenate([params["wsa"], params["wsb"]], axis=0)       # (2H, 4H)
    lns = jnp.concatenate([params["lns_g"], params["lns_b"]], axis=0)  # (2, 4H)
    lnh = jnp.concatenate([params["lnh_g"], params["lnh_b"]], axis=0)  # (2, H)

    kernel = functools.partial(_gru2d_diag_kernel, B=B, H=H, K=K)

    def resident(shape):                 # constant block index -> fetched once
        return pl.BlockSpec(shape, lambda t: tuple(0 for _ in shape))

    # explicit scoped-VMEM budget: 2x streamed blocks + residents + sbuf, plus
    # slack; capped at 64 MiB so the same config also fits a v7x TensorCore.
    fl = 4  # f32 bytes
    est = fl * (2 * K * _round_up(R, 8) * _round_up(4 * H, 128)        # ig stream
                + 2 * K * _round_up(R, 8) * _round_up(H, 128)          # out stream
                + Nd_pad * _round_up(R, 8) * 128                       # mask
                + _round_up(2 * H, 8) * _round_up(4 * H, 128)          # Ws
                + 8 * _round_up(4 * H, 128) + 8 * _round_up(H, 128)    # LN params
                + _round_up(S, 8) * _round_up(H, 128))                 # sbuf
    vmem_limit = int(min(64 * 1024 * 1024, max(8 * 1024 * 1024, 2 * est)))

    diag_h = pl.pallas_call(
        kernel,
        out_shape=jax.ShapeDtypeStruct((Nd_pad, R, H), jnp.float32),
        grid_spec=pltpu.PrefetchScalarGridSpec(
            num_scalar_prefetch=0,
            grid=(Nd_pad // K,),
            in_specs=[
                pl.BlockSpec((K, R, 4 * H), lambda t: (t, 0, 0)),   # igates stream
                resident((Nd_pad, R, 1)),                           # mask (resident)
                resident((2 * H, 4 * H)),                           # stacked Ws
                resident((2, 4 * H)),                               # LNs gamma/beta
                resident((2, H)),                                   # LNh gamma/beta
            ],
            out_specs=pl.BlockSpec((K, R, H), lambda t: (t, 0, 0)), # only new h rows
            scratch_shapes=[pltpu.VMEM((S, H), jnp.float32)],
        ),
        compiler_params=pltpu.CompilerParams(
            dimension_semantics=("arbitrary",),        # sequential wavefront
            vmem_limit_bytes=vmem_limit),
    )(igd, md, ws, lns, lnh)

    # Scatter the per-diagonal h blocks back into the (T0+1, T1+1, B, H) state
    # grid (flipped frame, exactly what PyTorch returns as `states`):
    #   out[t, i] = states[i + 1, i + T1 - 1 - t]  (masked h of slot i at step t)
    out_r = diag_h.reshape(Nd_pad, T0, B, H)
    mm = jnp.arange(T0 + 1)[:, None]
    nn = jnp.arange(T1 + 1)[None, :]
    tt = mm + (T1 - 2) - nn                  # step that wrote states[m, n]
    written = (mm >= 1) & (tt >= 0)          # row 0 / top-right corner stay zero
    vals = out_r[jnp.clip(tt, 0, Nd_pad - 1), jnp.clip(mm - 1, 0, T0 - 1)]
    states = jnp.where(written[..., None, None], vals, 0.0)

    # states_s = states[1:, :-1].permute(2,0,1,3).flip(2)
    states_s = jnp.transpose(states[1:, :-1], (2, 0, 1, 3))[:, :, ::-1, :]
    return states_s, states


# --------------------------- pure-JAX reference -----------------------------


def gru2d_reference(x, masks, params):
    """Cell-by-cell port of GRU2dLayer.forward (layer_norm=True, dropout=0)."""
    B, T0, T1, E = x.shape
    H = params["lnh_g"].shape[-1]
    ws = jnp.concatenate([params["wsa"], params["wsb"]], axis=0)   # (2H, 4H)

    def ln(v, g, b):
        mu = jnp.mean(v, -1, keepdims=True)
        var = jnp.mean((v - mu) ** 2, -1, keepdims=True)
        return (v - mu) / jnp.sqrt(var + _LN_EPS) * g + b

    def cell(xv, s_prev0, s_prev1):
        s = jnp.concatenate([s_prev0, s_prev1], -1)
        ig = ln(xv @ params["wi"], params["lni_g"], params["lni_b"])
        sg = ln(s @ ws, params["lns_g"], params["lns_b"])
        g = ig + sg
        r_inv = jax.nn.sigmoid(g[:, :H])
        i_g = jax.nn.sigmoid(g[:, H:2 * H])
        l_g = jax.nn.sigmoid(g[:, 3 * H:])
        n = jnp.tanh(g[:, 2 * H:3 * H] - r_inv * sg[:, 2 * H:3 * H])
        h = n + i_g * (l_g * s_prev0 + (1.0 - l_g) * s_prev1 - n)
        return ln(h, params["lnh_g"], params["lnh_b"])

    # transformed frame: x.permute(1,2,0,3).flip(1), masks likewise
    x_t = jnp.transpose(x, (1, 2, 0, 3))[:, ::-1]
    m_t = jnp.transpose(masks.astype(jnp.float32), (1, 2, 0))[:, ::-1][..., None]
    states = jnp.zeros((T0 + 1, T1 + 1, B, H), jnp.float32)
    for off in range(T1 - 1, -T0, -1):          # same anti-diagonal order as PyTorch
        for i in range(T0):
            j = i + off
            if 0 <= j < T1:
                h = cell(x_t[i, j], states[i + 1, j + 1], states[i, j]) * m_t[i, j]
                states = states.at[i + 1, j].set(h)
    states_s = jnp.transpose(states[1:, :-1], (2, 0, 1, 3))[:, :, ::-1, :]
    return states_s, states


# --------------------------------- setup ------------------------------------


def init_params(key, E, H):
    """LNGRU2dCell params; Linear weights stored as (in, out) (= W.T), bias=None."""
    ks = jax.random.split(key, 9)
    s_i = 1.0 / np.sqrt(E)
    s_s = 1.0 / np.sqrt(2 * H)
    return dict(
        wi=s_i * jax.random.normal(ks[0], (E, 4 * H), jnp.float32),
        wsa=s_s * jax.random.normal(ks[1], (H, 4 * H), jnp.float32),  # s_prev0 half
        wsb=s_s * jax.random.normal(ks[2], (H, 4 * H), jnp.float32),  # s_prev1 half
        lni_g=1.0 + 0.1 * jax.random.normal(ks[3], (1, 4 * H), jnp.float32),
        lni_b=0.1 * jax.random.normal(ks[4], (1, 4 * H), jnp.float32),
        lns_g=1.0 + 0.1 * jax.random.normal(ks[5], (1, 4 * H), jnp.float32),
        lns_b=0.1 * jax.random.normal(ks[6], (1, 4 * H), jnp.float32),
        lnh_g=1.0 + 0.1 * jax.random.normal(ks[7], (1, H), jnp.float32),
        lnh_b=0.1 * jax.random.normal(ks[8], (1, H), jnp.float32),
    )


if __name__ == "__main__":
    B, T0, T1, E, H = 2, 8, 8, 16, 32
    key = jax.random.PRNGKey(0)
    kx, km, kp = jax.random.split(key, 3)
    x = jax.random.normal(kx, (B, T0, T1, E), jnp.float32)
    masks = (jax.random.uniform(km, (B, T0, T1)) > 0.25).astype(jnp.float32)
    params = init_params(kp, E, H)

    states_s, states = jax.block_until_ready(gru2d_layer(x, masks, params))

    assert states_s.shape == (B, T0, T1, H)
    assert states.shape == (T0 + 1, T1 + 1, B, H)

    ref_s, ref_states = gru2d_reference(x, masks, params)
    np.testing.assert_allclose(np.asarray(states_s), np.asarray(ref_s),
                               rtol=2e-3, atol=2e-3)
    np.testing.assert_allclose(np.asarray(states), np.asarray(ref_states),
                               rtol=2e-3, atol=2e-3)
    print("KERNEL_OK")
</pallas_src>

<mosaic_0001>
module attributes {stable_mosaic.version = 11 : i64} {
  func.func @_gru2d_diag_kernel(%arg0: i32, %arg1: memref<4x16x128xf32, #tpu.memory_space<vmem>>, %arg2: memref<16x16x1xf32, #tpu.memory_space<vmem>>, %arg3: memref<64x128xf32, #tpu.memory_space<vmem>>, %arg4: memref<2x128xf32, #tpu.memory_space<vmem>>, %arg5: memref<2x32xf32, #tpu.memory_space<vmem>>, %arg6: memref<4x16x32xf32, #tpu.memory_space<vmem>>, %arg7: memref<18x32xf32, #tpu.memory_space<vmem>>) attributes {dimension_semantics = [#tpu.dimension_semantics<arbitrary>], iteration_bounds = array<i64: 4>, scalar_prefetch = 0 : i64, scratch_operands = 1 : i64, tpu.core_type = #tpu.core_type<tc>, window_params = [{transform_indices = @transform_0, window_bounds = array<i64: 4, 16, 128>}, {pipeline_mode = #tpu.pipeline_mode<synchronous>, transform_indices = @transform_1, window_bounds = array<i64: 16, 16, 1>}, {pipeline_mode = #tpu.pipeline_mode<synchronous>, transform_indices = @transform_2, window_bounds = array<i64: 64, 128>}, {pipeline_mode = #tpu.pipeline_mode<synchronous>, transform_indices = @transform_3, window_bounds = array<i64: 2, 128>}, {pipeline_mode = #tpu.pipeline_mode<synchronous>, transform_indices = @transform_4, window_bounds = array<i64: 2, 32>}, {transform_indices = @transform_5, window_bounds = array<i64: 4, 16, 32>}]} {
    %c0_i32 = arith.constant 0 : i32
    %0 = arith.cmpi eq, %arg0, %c0_i32 : i32
    %1 = arith.extui %0 : i1 to i32
    %c0_i32_0 = arith.constant 0 : i32
    %2 = arith.cmpi ne, %1, %c0_i32_0 : i32
    scf.if %2 {
      %cst_132 = arith.constant 0.000000e+00 : f32
      %383 = vector.broadcast %cst_132 : f32 to vector<18x32xf32>
      %c0_133 = arith.constant 0 : index
      %c0_134 = arith.constant 0 : index
      %384 = vector.load %arg7[%c0_133, %c0_134] : memref<18x32xf32, #tpu.memory_space<vmem>>, vector<18x32xf32>
      tpu.vector_store %arg7[%c0_133, %c0_134], %383 {strides = array<i32>} : memref<18x32xf32, #tpu.memory_space<vmem>>, vector<18x32xf32>,
    } else {
    }
    %c0 = arith.constant 0 : index
    %c0_1 = arith.constant 0 : index
    %3 = vector.load %arg4[%c0, %c0_1] : memref<2x128xf32, #tpu.memory_space<vmem>>, vector<1x128xf32>
    %c1 = arith.constant 1 : index
    %c0_2 = arith.constant 0 : index
    %4 = vector.load %arg4[%c1, %c0_2] : memref<2x128xf32, #tpu.memory_space<vmem>>, vector<1x128xf32>
    %c0_3 = arith.constant 0 : index
    %c0_4 = arith.constant 0 : index
    %5 = vector.load %arg5[%c0_3, %c0_4] : memref<2x32xf32, #tpu.memory_space<vmem>>, vector<1x32xf32>
    %c1_5 = arith.constant 1 : index
    %c0_6 = arith.constant 0 : index
    %6 = vector.load %arg5[%c1_5, %c0_6] : memref<2x32xf32, #tpu.memory_space<vmem>>, vector<1x32xf32>
    %c0_7 = arith.constant 0 : index
    %c0_8 = arith.constant 0 : index
    %c0_9 = arith.constant 0 : index
    %7 = vector.load %arg1[%c0_7, %c0_8, %c0_9] : memref<4x16x128xf32, #tpu.memory_space<vmem>>, vector<1x16x128xf32>
    %8 = vector.shape_cast %7 : vector<1x16x128xf32> to vector<16x128xf32>
    %c4_i32 = arith.constant 4 : i32
    %9 = arith.muli %arg0, %c4_i32 : i32
    %c0_i32_10 = arith.constant 0 : i32
    %10 = arith.addi %9, %c0_i32_10 : i32
    %11 = arith.index_cast %10 : i32 to index
    %c0_11 = arith.constant 0 : index
    %c0_12 = arith.constant 0 : index
    %12 = vector.load %arg2[%11, %c0_11, %c0_12] : memref<16x16x1xf32, #tpu.memory_space<vmem>>, vector<1x16x1xf32>
    %13 = vector.shape_cast %12 : vector<1x16x1xf32> to vector<16x1xf32>
    %c2 = arith.constant 2 : index
    %c0_13 = arith.constant 0 : index
    %14 = vector.load %arg7[%c2, %c0_13] : memref<18x32xf32, #tpu.memory_space<vmem>>, vector<16x32xf32>
    %c0_14 = arith.constant 0 : index
    %c0_15 = arith.constant 0 : index
    %15 = vector.load %arg7[%c0_14, %c0_15] : memref<18x32xf32, #tpu.memory_space<vmem>>, vector<16x32xf32>
    %16 = tpu.concatenate %14, %15 in 1 : vector<16x32xf32>, vector<16x32xf32> -> vector<16x64xf32>
    %c0_16 = arith.constant 0 : index
    %c0_17 = arith.constant 0 : index
    %17 = vector.load %arg3[%c0_16, %c0_17] : memref<64x128xf32, #tpu.memory_space<vmem>>, vector<64x128xf32>
    %cst = arith.constant dense<0.000000e+00> : vector<16x128xf32>
    %18 = tpu.matmul %16, %17, %cst {dimension_numbers = #tpu.dot_dimension_numbers<[1], [0], [0], [1], [0, 0, 1, 1], [], []>} : vector<16x64xf32>, vector<64x128xf32>, vector<16x128xf32> -> vector<16x128xf32>
    %cst_18 = arith.constant dense<0.000000e+00> : vector<16xf32>
    %19 = vector.multi_reduction <add>, %18, %cst_18 [1] : vector<16x128xf32> to vector<16xf32>
    %20 = vector.shape_cast %19 : vector<16xf32> to vector<16x1xf32>
    %cst_19 = arith.constant 7.812500e-03 : f32
    %21 = vector.broadcast %cst_19 : f32 to vector<16x1xf32>
    %22 = arith.mulf %20, %21 : vector<16x1xf32>
    %23 = arith.mulf %18, %18 : vector<16x128xf32>
    %cst_20 = arith.constant dense<0.000000e+00> : vector<16xf32>
    %24 = vector.multi_reduction <add>, %23, %cst_20 [1] : vector<16x128xf32> to vector<16xf32>
    %25 = vector.shape_cast %24 : vector<16xf32> to vector<16x1xf32>
    %cst_21 = arith.constant 7.812500e-03 : f32
    %26 = vector.broadcast %cst_21 : f32 to vector<16x1xf32>
    %27 = arith.mulf %25, %26 : vector<16x1xf32>
    %28 = vector.broadcast %22 : vector<16x1xf32> to vector<16x128xf32>
    %29 = arith.subf %18, %28 : vector<16x128xf32>
    %30 = arith.mulf %22, %22 : vector<16x1xf32>
    %31 = arith.subf %27, %30 : vector<16x1xf32>
    %cst_22 = arith.constant 9.99999974E-6 : f32
    %32 = vector.broadcast %cst_22 : f32 to vector<16x1xf32>
    %33 = arith.addf %31, %32 : vector<16x1xf32>
    %34 = math.rsqrt %33 : vector<16x1xf32>
    %35 = vector.broadcast %34 : vector<16x1xf32> to vector<16x128xf32>
    %36 = arith.mulf %29, %35 : vector<16x128xf32>
    %37 = vector.broadcast %3 : vector<1x128xf32> to vector<16x128xf32>
    %38 = arith.mulf %36, %37 : vector<16x128xf32>
    %39 = vector.broadcast %4 : vector<1x128xf32> to vector<16x128xf32>
    %40 = arith.addf %38, %39 : vector<16x128xf32>
    %41 = arith.addf %8, %40 : vector<16x128xf32>
    %42 = vector.extract_strided_slice %41 {offsets = [0, 0], sizes = [16, 32], strides = [1, 1]} : vector<16x128xf32> to vector<16x32xf32>
    %43 = arith.negf %42 : vector<16x32xf32>
    %44 = math.exp %43 : vector<16x32xf32>
    %cst_23 = arith.constant 1.000000e+00 : f32
    %45 = vector.broadcast %cst_23 : f32 to vector<16x32xf32>
    %46 = arith.addf %45, %44 : vector<16x32xf32>
    %47 = arith.divf %45, %46 : vector<16x32xf32>
    %48 = vector.extract_strided_slice %41 {offsets = [0, 32], sizes = [16, 32], strides = [1, 1]} : vector<16x128xf32> to vector<16x32xf32>
    %49 = arith.negf %48 : vector<16x32xf32>
    %50 = math.exp %49 : vector<16x32xf32>
    %cst_24 = arith.constant 1.000000e+00 : f32
    %51 = vector.broadcast %cst_24 : f32 to vector<16x32xf32>
    %52 = arith.addf %51, %50 : vector<16x32xf32>
    %53 = arith.divf %51, %52 : vector<16x32xf32>
    %54 = vector.extract_strided_slice %41 {offsets = [0, 96], sizes = [16, 32], strides = [1, 1]} : vector<16x128xf32> to vector<16x32xf32>
    %55 = arith.negf %54 : vector<16x32xf32>
    %56 = math.exp %55 : vector<16x32xf32>
    %cst_25 = arith.constant 1.000000e+00 : f32
    %57 = vector.broadcast %cst_25 : f32 to vector<16x32xf32>
    %58 = arith.addf %57, %56 : vector<16x32xf32>
    %59 = arith.divf %57, %58 : vector<16x32xf32>
    %60 = vector.extract_strided_slice %41 {offsets = [0, 64], sizes = [16, 32], strides = [1, 1]} : vector<16x128xf32> to vector<16x32xf32>
    %61 = vector.extract_strided_slice %40 {offsets = [0, 64], sizes = [16, 32], strides = [1, 1]} : vector<16x128xf32> to vector<16x32xf32>
    %62 = arith.mulf %47, %61 : vector<16x32xf32>
    %63 = arith.subf %60, %62 : vector<16x32xf32>
    %64 = math.tanh %63 : vector<16x32xf32>
    %65 = arith.mulf %59, %14 : vector<16x32xf32>
    %cst_26 = arith.constant 1.000000e+00 : f32
    %66 = vector.broadcast %cst_26 : f32 to vector<16x32xf32>
    %67 = arith.subf %66, %59 : vector<16x32xf32>
    %68 = arith.mulf %67, %15 : vector<16x32xf32>
    %69 = arith.addf %65, %68 : vector<16x32xf32>
    %70 = arith.subf %69, %64 : vector<16x32xf32>
    %71 = arith.mulf %53, %70 : vector<16x32xf32>
    %72 = arith.addf %64, %71 : vector<16x32xf32>
    %cst_27 = arith.constant dense<0.000000e+00> : vector<16xf32>
    %73 = vector.multi_reduction <add>, %72, %cst_27 [1] : vector<16x32xf32> to vector<16xf32>
    %74 = vector.shape_cast %73 : vector<16xf32> to vector<16x1xf32>
    %cst_28 = arith.constant 3.125000e-02 : f32
    %75 = vector.broadcast %cst_28 : f32 to vector<16x1xf32>
    %76 = arith.mulf %74, %75 : vector<16x1xf32>
    %77 = arith.mulf %72, %72 : vector<16x32xf32>
    %cst_29 = arith.constant dense<0.000000e+00> : vector<16xf32>
    %78 = vector.multi_reduction <add>, %77, %cst_29 [1] : vector<16x32xf32> to vector<16xf32>
    %79 = vector.shape_cast %78 : vector<16xf32> to vector<16x1xf32>
    %cst_30 = arith.constant 3.125000e-02 : f32
    %80 = vector.broadcast %cst_30 : f32 to vector<16x1xf32>
    %81 = arith.mulf %79, %80 : vector<16x1xf32>
    %82 = vector.broadcast %76 : vector<16x1xf32> to vector<16x32xf32>
    %83 = arith.subf %72, %82 : vector<16x32xf32>
    %84 = arith.mulf %76, %76 : vector<16x1xf32>
    %85 = arith.subf %81, %84 : vector<16x1xf32>
    %cst_31 = arith.constant 9.99999974E-6 : f32
    %86 = vector.broadcast %cst_31 : f32 to vector<16x1xf32>
    %87 = arith.addf %85, %86 : vector<16x1xf32>
    %88 = math.rsqrt %87 : vector<16x1xf32>
    %89 = vector.broadcast %88 : vector<16x1xf32> to vector<16x32xf32>
    %90 = arith.mulf %83, %89 : vector<16x32xf32>
    %91 = vector.broadcast %5 : vector<1x32xf32> to vector<16x32xf32>
    %92 = arith.mulf %90, %91 : vector<16x32xf32>
    %93 = vector.broadcast %6 : vector<1x32xf32> to vector<16x32xf32>
    %94 = arith.addf %92, %93 : vector<16x32xf32>
    %95 = vector.broadcast %13 : vector<16x1xf32> to vector<16x32xf32>
    %96 = arith.mulf %94, %95 : vector<16x32xf32>
    %c2_32 = arith.constant 2 : index
    %c0_33 = arith.constant 0 : index
    %97 = vector.load %arg7[%c2_32, %c0_33] : memref<18x32xf32, #tpu.memory_space<vmem>>, vector<16x32xf32>
    tpu.vector_store %arg7[%c2_32, %c0_33], %96 {strides = array<i32>} : memref<18x32xf32, #tpu.memory_space<vmem>>, vector<16x32xf32>,
    %c0_34 = arith.constant 0 : index
    %c0_35 = arith.constant 0 : index
    %c0_36 = arith.constant 0 : index
    %98 = vector.load %arg6[%c0_34, %c0_35, %c0_36] : memref<4x16x32xf32, #tpu.memory_space<vmem>>, vector<1x16x32xf32>
    %99 = vector.shape_cast %98 : vector<1x16x32xf32> to vector<16x32xf32>
    %100 = vector.shape_cast %96 : vector<16x32xf32> to vector<1x16x32xf32>
    tpu.vector_store %arg6[%c0_34, %c0_35, %c0_36], %100 {strides = array<i32>} : memref<4x16x32xf32, #tpu.memory_space<vmem>>, vector<1x16x32xf32>,
    %c1_37 = arith.constant 1 : index
    %c0_38 = arith.constant 0 : index
    %c0_39 = arith.constant 0 : index
    %101 = vector.load %arg1[%c1_37, %c0_38, %c0_39] : memref<4x16x128xf32, #tpu.memory_space<vmem>>, vector<1x16x128xf32>
    %102 = vector.shape_cast %101 : vector<1x16x128xf32> to vector<16x128xf32>
    %c4_i32_40 = arith.constant 4 : i32
    %103 = arith.muli %arg0, %c4_i32_40 : i32
    %c1_i32 = arith.constant 1 : i32
    %104 = arith.addi %103, %c1_i32 : i32
    %105 = arith.index_cast %104 : i32 to index
    %c0_41 = arith.constant 0 : index
    %c0_42 = arith.constant 0 : index
    %106 = vector.load %arg2[%105, %c0_41, %c0_42] : memref<16x16x1xf32, #tpu.memory_space<vmem>>, vector<1x16x1xf32>
    %107 = vector.shape_cast %106 : vector<1x16x1xf32> to vector<16x1xf32>
    %c2_43 = arith.constant 2 : index
    %c0_44 = arith.constant 0 : index
    %108 = vector.load %arg7[%c2_43, %c0_44] : memref<18x32xf32, #tpu.memory_space<vmem>>, vector<16x32xf32>
    %c0_45 = arith.constant 0 : index
    %c0_46 = arith.constant 0 : index
    %109 = vector.load %arg7[%c0_45, %c0_46] : memref<18x32xf32, #tpu.memory_space<vmem>>, vector<16x32xf32>
    %110 = tpu.concatenate %108, %109 in 1 : vector<16x32xf32>, vector<16x32xf32> -> vector<16x64xf32>
    %c0_47 = arith.constant 0 : index
    %c0_48 = arith.constant 0 : index
    %111 = vector.load %arg3[%c0_47, %c0_48] : memref<64x128xf32, #tpu.memory_space<vmem>>, vector<64x128xf32>
    %cst_49 = arith.constant dense<0.000000e+00> : vector<16x128xf32>
    %112 = tpu.matmul %110, %111, %cst_49 {dimension_numbers = #tpu.dot_dimension_numbers<[1], [0], [0], [1], [0, 0, 1, 1], [], []>} : vector<16x64xf32>, vector<64x128xf32>, vector<16x128xf32> -> vector<16x128xf32>
    %cst_50 = arith.constant dense<0.000000e+00> : vector<16xf32>
    %113 = vector.multi_reduction <add>, %112, %cst_50 [1] : vector<16x128xf32> to vector<16xf32>
    %114 = vector.shape_cast %113 : vector<16xf32> to vector<16x1xf32>
    %cst_51 = arith.constant 7.812500e-03 : f32
    %115 = vector.broadcast %cst_51 : f32 to vector<16x1xf32>
    %116 = arith.mulf %114, %115 : vector<16x1xf32>
    %117 = arith.mulf %112, %112 : vector<16x128xf32>
    %cst_52 = arith.constant dense<0.000000e+00> : vector<16xf32>
    %118 = vector.multi_reduction <add>, %117, %cst_52 [1] : vector<16x128xf32> to vector<16xf32>
    %119 = vector.shape_cast %118 : vector<16xf32> to vector<16x1xf32>
    %cst_53 = arith.constant 7.812500e-03 : f32
    %120 = vector.broadcast %cst_53 : f32 to vector<16x1xf32>
    %121 = arith.mulf %119, %120 : vector<16x1xf32>
    %122 = vector.broadcast %116 : vector<16x1xf32> to vector<16x128xf32>
    %123 = arith.subf %112, %122 : vector<16x128xf32>
    %124 = arith.mulf %116, %116 : vector<16x1xf32>
    %125 = arith.subf %121, %124 : vector<16x1xf32>
    %cst_54 = arith.constant 9.99999974E-6 : f32
    %126 = vector.broadcast %cst_54 : f32 to vector<16x1xf32>
    %127 = arith.addf %125, %126 : vector<16x1xf32>
    %128 = math.rsqrt %127 : vector<16x1xf32>
    %129 = vector.broadcast %128 : vector<16x1xf32> to vector<16x128xf32>
    %130 = arith.mulf %123, %129 : vector<16x128xf32>
    %131 = vector.broadcast %3 : vector<1x128xf32> to vector<16x128xf32>
    %132 = arith.mulf %130, %131 : vector<16x128xf32>
    %133 = vector.broadcast %4 : vector<1x128xf32> to vector<16x128xf32>
    %134 = arith.addf %132, %133 : vector<16x128xf32>
    %135 = arith.addf %102, %134 : vector<16x128xf32>
    %136 = vector.extract_strided_slice %135 {offsets = [0, 0], sizes = [16, 32], strides = [1, 1]} : vector<16x128xf32> to vector<16x32xf32>
    %137 = arith.negf %136 : vector<16x32xf32>
    %138 = math.exp %137 : vector<16x32xf32>
    %cst_55 = arith.constant 1.000000e+00 : f32
    %139 = vector.broadcast %cst_55 : f32 to vector<16x32xf32>
    %140 = arith.addf %139, %138 : vector<16x32xf32>
    %141 = arith.divf %139, %140 : vector<16x32xf32>
    %142 = vector.extract_strided_slice %135 {offsets = [0, 32], sizes = [16, 32], strides = [1, 1]} : vector<16x128xf32> to vector<16x32xf32>
    %143 = arith.negf %142 : vector<16x32xf32>
    %144 = math.exp %143 : vector<16x32xf32>
    %cst_56 = arith.constant 1.000000e+00 : f32
    %145 = vector.broadcast %cst_56 : f32 to vector<16x32xf32>
    %146 = arith.addf %145, %144 : vector<16x32xf32>
    %147 = arith.divf %145, %146 : vector<16x32xf32>
    %148 = vector.extract_strided_slice %135 {offsets = [0, 96], sizes = [16, 32], strides = [1, 1]} : vector<16x128xf32> to vector<16x32xf32>
    %149 = arith.negf %148 : vector<16x32xf32>
    %150 = math.exp %149 : vector<16x32xf32>
    %cst_57 = arith.constant 1.000000e+00 : f32
    %151 = vector.broadcast %cst_57 : f32 to vector<16x32xf32>
    %152 = arith.addf %151, %150 : vector<16x32xf32>
    %153 = arith.divf %151, %152 : vector<16x32xf32>
    %154 = vector.extract_strided_slice %135 {offsets = [0, 64], sizes = [16, 32], strides = [1, 1]} : vector<16x128xf32> to vector<16x32xf32>
    %155 = vector.extract_strided_slice %134 {offsets = [0, 64], sizes = [16, 32], strides = [1, 1]} : vector<16x128xf32> to vector<16x32xf32>
    %156 = arith.mulf %141, %155 : vector<16x32xf32>
    %157 = arith.subf %154, %156 : vector<16x32xf32>
    %158 = math.tanh %157 : vector<16x32xf32>
    %159 = arith.mulf %153, %108 : vector<16x32xf32>
    %cst_58 = arith.constant 1.000000e+00 : f32
    %160 = vector.broadcast %cst_58 : f32 to vector<16x32xf32>
    %161 = arith.subf %160, %153 : vector<16x32xf32>
    %162 = arith.mulf %161, %109 : vector<16x32xf32>
    %163 = arith.addf %159, %162 : vector<16x32xf32>
    %164 = arith.subf %163, %158 : vector<16x32xf32>
    %165 = arith.mulf %147, %164 : vector<16x32xf32>
    %166 = arith.addf %158, %165 : vector<16x32xf32>
    %cst_59 = arith.constant dense<0.000000e+00> : vector<16xf32>
    %167 = vector.multi_reduction <add>, %166, %cst_59 [1] : vector<16x32xf32> to vector<16xf32>
    %168 = vector.shape_cast %167 : vector<16xf32> to vector<16x1xf32>
    %cst_60 = arith.constant 3.125000e-02 : f32
    %169 = vector.broadcast %cst_60 : f32 to vector<16x1xf32>
    %170 = arith.mulf %168, %169 : vector<16x1xf32>
    %171 = arith.mulf %166, %166 : vector<16x32xf32>
    %cst_61 = arith.constant dense<0.000000e+00> : vector<16xf32>
    %172 = vector.multi_reduction <add>, %171, %cst_61 [1] : vector<16x32xf32> to vector<16xf32>
    %173 = vector.shape_cast %172 : vector<16xf32> to vector<16x1xf32>
    %cst_62 = arith.constant 3.125000e-02 : f32
    %174 = vector.broadcast %cst_62 : f32 to vector<16x1xf32>
    %175 = arith.mulf %173, %174 : vector<16x1xf32>
    %176 = vector.broadcast %170 : vector<16x1xf32> to vector<16x32xf32>
    %177 = arith.subf %166, %176 : vector<16x32xf32>
    %178 = arith.mulf %170, %170 : vector<16x1xf32>
    %179 = arith.subf %175, %178 : vector<16x1xf32>
    %cst_63 = arith.constant 9.99999974E-6 : f32
    %180 = vector.broadcast %cst_63 : f32 to vector<16x1xf32>
    %181 = arith.addf %179, %180 : vector<16x1xf32>
    %182 = math.rsqrt %181 : vector<16x1xf32>
    %183 = vector.broadcast %182 : vector<16x1xf32> to vector<16x32xf32>
    %184 = arith.mulf %177, %183 : vector<16x32xf32>
    %185 = vector.broadcast %5 : vector<1x32xf32> to vector<16x32xf32>
    %186 = arith.mulf %184, %185 : vector<16x32xf32>
    %187 = vector.broadcast %6 : vector<1x32xf32> to vector<16x32xf32>
    %188 = arith.addf %186, %187 : vector<16x32xf32>
    %189 = vector.broadcast %107 : vector<16x1xf32> to vector<16x32xf32>
    %190 = arith.mulf %188, %189 : vector<16x32xf32>
    %c2_64 = arith.constant 2 : index
    %c0_65 = arith.constant 0 : index
    %191 = vector.load %arg7[%c2_64, %c0_65] : memref<18x32xf32, #tpu.memory_space<vmem>>, vector<16x32xf32>
    tpu.vector_store %arg7[%c2_64, %c0_65], %190 {strides = array<i32>} : memref<18x32xf32, #tpu.memory_space<vmem>>, vector<16x32xf32>,
    %c1_66 = arith.constant 1 : index
    %c0_67 = arith.constant 0 : index
    %c0_68 = arith.constant 0 : index
    %192 = vector.load %arg6[%c1_66, %c0_67, %c0_68] : memref<4x16x32xf32, #tpu.memory_space<vmem>>, vector<1x16x32xf32>
    %193 = vector.shape_cast %192 : vector<1x16x32xf32> to vector<16x32xf32>
    %194 = vector.shape_cast %190 : vector<16x32xf32> to vector<1x16x32xf32>
    tpu.vector_store %arg6[%c1_66, %c0_67, %c0_68], %194 {strides = array<i32>} : memref<4x16x32xf32, #tpu.memory_space<vmem>>, vector<1x16x32xf32>,
    %c2_69 = arith.constant 2 : index
    %c0_70 = arith.constant 0 : index
    %c0_71 = arith.constant 0 : index
    %195 = vector.load %arg1[%c2_69, %c0_70, %c0_71] : memref<4x16x128xf32, #tpu.memory_space<vmem>>, vector<1x16x128xf32>
    %196 = vector.shape_cast %195 : vector<1x16x128xf32> to vector<16x128xf32>
    %c4_i32_72 = arith.constant 4 : i32
    %197 = arith.muli %arg0, %c4_i32_72 : i32
    %c2_i32 = arith.constant 2 : i32
    %198 = arith.addi %197, %c2_i32 : i32
    %199 = arith.index_cast %198 : i32 to index
    %c0_73 = arith.constant 0 : index
    %c0_74 = arith.constant 0 : index
    %200 = vector.load %arg2[%199, %c0_73, %c0_74] : memref<16x16x1xf32, #tpu.memory_space<vmem>>, vector<1x16x1xf32>
    %201 = vector.shape_cast %200 : vector<1x16x1xf32> to vector<16x1xf32>
    %c2_75 = arith.constant 2 : index
    %c0_76 = arith.constant 0 : index
    %202 = vector.load %arg7[%c2_75, %c0_76] : memref<18x32xf32, #tpu.memory_space<vmem>>, vector<16x32xf32>
    %c0_77 = arith.constant 0 : index
    %c0_78 = arith.constant 0 : index
    %203 = vector.load %arg7[%c0_77, %c0_78] : memref<18x32xf32, #tpu.memory_space<vmem>>, vector<16x32xf32>
    %204 = tpu.concatenate %202, %203 in 1 : vector<16x32xf32>, vector<16x32xf32> -> vector<16x64xf32>
    %c0_79 = arith.constant 0 : index
    %c0_80 = arith.constant 0 : index
    %205 = vector.load %arg3[%c0_79, %c0_80] : memref<64x128xf32, #tpu.memory_space<vmem>>, vector<64x128xf32>
    %cst_81 = arith.constant dense<0.000000e+00> : vector<16x128xf32>
    %206 = tpu.matmul %204, %205, %cst_81 {dimension_numbers = #tpu.dot_dimension_numbers<[1], [0], [0], [1], [0, 0, 1, 1], [], []>} : vector<16x64xf32>, vector<64x128xf32>, vector<16x128xf32> -> vector<16x128xf32>
    %cst_82 = arith.constant dense<0.000000e+00> : vector<16xf32>
    %207 = vector.multi_reduction <add>, %206, %cst_82 [1] : vector<16x128xf32> to vector<16xf32>
    %208 = vector.shape_cast %207 : vector<16xf32> to vector<16x1xf32>
    %cst_83 = arith.constant 7.812500e-03 : f32
    %209 = vector.broadcast %cst_83 : f32 to vector<16x1xf32>
    %210 = arith.mulf %208, %209 : vector<16x1xf32>
    %211 = arith.mulf %206, %206 : vector<16x128xf32>
    %cst_84 = arith.constant dense<0.000000e+00> : vector<16xf32>
    %212 = vector.multi_reduction <add>, %211, %cst_84 [1] : vector<16x128xf32> to vector<16xf32>
    %213 = vector.shape_cast %212 : vector<16xf32> to vector<16x1xf32>
    %cst_85 = arith.constant 7.812500e-03 : f32
    %214 = vector.broadcast %cst_85 : f32 to vector<16x1xf32>
    %215 = arith.mulf %213, %214 : vector<16x1xf32>
    %216 = vector.broadcast %210 : vector<16x1xf32> to vector<16x128xf32>
    %217 = arith.subf %206, %216 : vector<16x128xf32>
    %218 = arith.mulf %210, %210 : vector<16x1xf32>
    %219 = arith.subf %215, %218 : vector<16x1xf32>
    %cst_86 = arith.constant 9.99999974E-6 : f32
    %220 = vector.broadcast %cst_86 : f32 to vector<16x1xf32>
    %221 = arith.addf %219, %220 : vector<16x1xf32>
    %222 = math.rsqrt %221 : vector<16x1xf32>
    %223 = vector.broadcast %222 : vector<16x1xf32> to vector<16x128xf32>
    %224 = arith.mulf %217, %223 : vector<16x128xf32>
    %225 = vector.broadcast %3 : vector<1x128xf32> to vector<16x128xf32>
    %226 = arith.mulf %224, %225 : vector<16x128xf32>
    %227 = vector.broadcast %4 : vector<1x128xf32> to vector<16x128xf32>
    %228 = arith.addf %226, %227 : vector<16x128xf32>
    %229 = arith.addf %196, %228 : vector<16x128xf32>
    %230 = vector.extract_strided_slice %229 {offsets = [0, 0], sizes = [16, 32], strides = [1, 1]} : vector<16x128xf32> to vector<16x32xf32>
    %231 = arith.negf %230 : vector<16x32xf32>
    %232 = math.exp %231 : vector<16x32xf32>
    %cst_87 = arith.constant 1.000000e+00 : f32
    %233 = vector.broadcast %cst_87 : f32 to vector<16x32xf32>
    %234 = arith.addf %233, %232 : vector<16x32xf32>
    %235 = arith.divf %233, %234 : vector<16x32xf32>
    %236 = vector.extract_strided_slice %229 {offsets = [0, 32], sizes = [16, 32], strides = [1, 1]} : vector<16x128xf32> to vector<16x32xf32>
    %237 = arith.negf %236 : vector<16x32xf32>
    %238 = math.exp %237 : vector<16x32xf32>
    %cst_88 = arith.constant 1.000000e+00 : f32
    %239 = vector.broadcast %cst_88 : f32 to vector<16x32xf32>
    %240 = arith.addf %239, %238 : vector<16x32xf32>
    %241 = arith.divf %239, %240 : vector<16x32xf32>
    %242 = vector.extract_strided_slice %229 {offsets = [0, 96], sizes = [16, 32], strides = [1, 1]} : vector<16x128xf32> to vector<16x32xf32>
    %243 = arith.negf %242 : vector<16x32xf32>
    %244 = math.exp %243 : vector<16x32xf32>
    %cst_89 = arith.constant 1.000000e+00 : f32
    %245 = vector.broadcast %cst_89 : f32 to vector<16x32xf32>
    %246 = arith.addf %245, %244 : vector<16x32xf32>
    %247 = arith.divf %245, %246 : vector<16x32xf32>
    %248 = vector.extract_strided_slice %229 {offsets = [0, 64], sizes = [16, 32], strides = [1, 1]} : vector<16x128xf32> to vector<16x32xf32>
    %249 = vector.extract_strided_slice %228 {offsets = [0, 64], sizes = [16, 32], strides = [1, 1]} : vector<16x128xf32> to vector<16x32xf32>
    %250 = arith.mulf %235, %249 : vector<16x32xf32>
    %251 = arith.subf %248, %250 : vector<16x32xf32>
    %252 = math.tanh %251 : vector<16x32xf32>
    %253 = arith.mulf %247, %202 : vector<16x32xf32>
    %cst_90 = arith.constant 1.000000e+00 : f32
    %254 = vector.broadcast %cst_90 : f32 to vector<16x32xf32>
    %255 = arith.subf %254, %247 : vector<16x32xf32>
    %256 = arith.mulf %255, %203 : vector<16x32xf32>
    %257 = arith.addf %253, %256 : vector<16x32xf32>
    %258 = arith.subf %257, %252 : vector<16x32xf32>
    %259 = arith.mulf %241, %258 : vector<16x32xf32>
    %260 = arith.addf %252, %259 : vector<16x32xf32>
    %cst_91 = arith.constant dense<0.000000e+00> : vector<16xf32>
    %261 = vector.multi_reduction <add>, %260, %cst_91 [1] : vector<16x32xf32> to vector<16xf32>
    %262 = vector.shape_cast %261 : vector<16xf32> to vector<16x1xf32>
    %cst_92 = arith.constant 3.125000e-02 : f32
    %263 = vector.broadcast %cst_92 : f32 to vector<16x1xf32>
    %264 = arith.mulf %262, %263 : vector<16x1xf32>
    %265 = arith.mulf %260, %260 : vector<16x32xf32>
    %cst_93 = arith.constant dense<0.000000e+00> : vector<16xf32>
    %266 = vector.multi_reduction <add>, %265, %cst_93 [1] : vector<16x32xf32> to vector<16xf32>
    %267 = vector.shape_cast %266 : vector<16xf32> to vector<16x1xf32>
    %cst_94 = arith.constant 3.125000e-02 : f32
    %268 = vector.broadcast %cst_94 : f32 to vector<16x1xf32>
    %269 = arith.mulf %267, %268 : vector<16x1xf32>
    %270 = vector.broadcast %264 : vector<16x1xf32> to vector<16x32xf32>
    %271 = arith.subf %260, %270 : vector<16x32xf32>
    %272 = arith.mulf %264, %264 : vector<16x1xf32>
    %273 = arith.subf %269, %272 : vector<16x1xf32>
    %cst_95 = arith.constant 9.99999974E-6 : f32
    %274 = vector.broadcast %cst_95 : f32 to vector<16x1xf32>
    %275 = arith.addf %273, %274 : vector<16x1xf32>
    %276 = math.rsqrt %275 : vector<16x1xf32>
    %277 = vector.broadcast %276 : vector<16x1xf32> to vector<16x32xf32>
    %278 = arith.mulf %271, %277 : vector<16x32xf32>
    %279 = vector.broadcast %5 : vector<1x32xf32> to vector<16x32xf32>
    %280 = arith.mulf %278, %279 : vector<16x32xf32>
    %281 = vector.broadcast %6 : vector<1x32xf32> to vector<16x32xf32>
    %282 = arith.addf %280, %281 : vector<16x32xf32>
    %283 = vector.broadcast %201 : vector<16x1xf32> to vector<16x32xf32>
    %284 = arith.mulf %282, %283 : vector<16x32xf32>
    %c2_96 = arith.constant 2 : index
    %c0_97 = arith.constant 0 : index
    %285 = vector.load %arg7[%c2_96, %c0_97] : memref<18x32xf32, #tpu.memory_space<vmem>>, vector<16x32xf32>
    tpu.vector_store %arg7[%c2_96, %c0_97], %284 {strides = array<i32>} : memref<18x32xf32, #tpu.memory_space<vmem>>, vector<16x32xf32>,
    %c2_98 = arith.constant 2 : index
    %c0_99 = arith.constant 0 : index
    %c0_100 = arith.constant 0 : index
    %286 = vector.load %arg6[%c2_98, %c0_99, %c0_100] : memref<4x16x32xf32, #tpu.memory_space<vmem>>, vector<1x16x32xf32>
    %287 = vector.shape_cast %286 : vector<1x16x32xf32> to vector<16x32xf32>
    %288 = vector.shape_cast %284 : vector<16x32xf32> to vector<1x16x32xf32>
    tpu.vector_store %arg6[%c2_98, %c0_99, %c0_100], %288 {strides = array<i32>} : memref<4x16x32xf32, #tpu.memory_space<vmem>>, vector<1x16x32xf32>,
    %c3 = arith.constant 3 : index
    %c0_101 = arith.constant 0 : index
    %c0_102 = arith.constant 0 : index
    %289 = vector.load %arg1[%c3, %c0_101, %c0_102] : memref<4x16x128xf32, #tpu.memory_space<vmem>>, vector<1x16x128xf32>
    %290 = vector.shape_cast %289 : vector<1x16x128xf32> to vector<16x128xf32>
    %c4_i32_103 = arith.constant 4 : i32
    %291 = arith.muli %arg0, %c4_i32_103 : i32
    %c3_i32 = arith.constant 3 : i32
    %292 = arith.addi %291, %c3_i32 : i32
    %293 = arith.index_cast %292 : i32 to index
    %c0_104 = arith.constant 0 : index
    %c0_105 = arith.constant 0 : index
    %294 = vector.load %arg2[%293, %c0_104, %c0_105] : memref<16x16x1xf32, #tpu.memory_space<vmem>>, vector<1x16x1xf32>
    %295 = vector.shape_cast %294 : vector<1x16x1xf32> to vector<16x1xf32>
    %c2_106 = arith.constant 2 : index
    %c0_107 = arith.constant 0 : index
    %296 = vector.load %arg7[%c2_106, %c0_107] : memref<18x32xf32, #tpu.memory_space<vmem>>, vector<16x32xf32>
    %c0_108 = arith.constant 0 : index
    %c0_109 = arith.constant 0 : index
    %297 = vector.load %arg7[%c0_108, %c0_109] : memref<18x32xf32, #tpu.memory_space<vmem>>, vector<16x32xf32>
    %298 = tpu.concatenate %296, %297 in 1 : vector<16x32xf32>, vector<16x32xf32> -> vector<16x64xf32>
    %c0_110 = arith.constant 0 : index
    %c0_111 = arith.constant 0 : index
    %299 = vector.load %arg3[%c0_110, %c0_111] : memref<64x128xf32, #tpu.memory_space<vmem>>, vector<64x128xf32>
    %cst_112 = arith.constant dense<0.000000e+00> : vector<16x128xf32>
    %300 = tpu.matmul %298, %299, %cst_112 {dimension_numbers = #tpu.dot_dimension_numbers<[1], [0], [0], [1], [0, 0, 1, 1], [], []>} : vector<16x64xf32>, vector<64x128xf32>, vector<16x128xf32> -> vector<16x128xf32>
    %cst_113 = arith.constant dense<0.000000e+00> : vector<16xf32>
    %301 = vector.multi_reduction <add>, %300, %cst_113 [1] : vector<16x128xf32> to vector<16xf32>
    %302 = vector.shape_cast %301 : vector<16xf32> to vector<16x1xf32>
    %cst_114 = arith.constant 7.812500e-03 : f32
    %303 = vector.broadcast %cst_114 : f32 to vector<16x1xf32>
    %304 = arith.mulf %302, %303 : vector<16x1xf32>
    %305 = arith.mulf %300, %300 : vector<16x128xf32>
    %cst_115 = arith.constant dense<0.000000e+00> : vector<16xf32>
    %306 = vector.multi_reduction <add>, %305, %cst_115 [1] : vector<16x128xf32> to vector<16xf32>
    %307 = vector.shape_cast %306 : vector<16xf32> to vector<16x1xf32>
    %cst_116 = arith.constant 7.812500e-03 : f32
    %308 = vector.broadcast %cst_116 : f32 to vector<16x1xf32>
    %309 = arith.mulf %307, %308 : vector<16x1xf32>
    %310 = vector.broadcast %304 : vector<16x1xf32> to vector<16x128xf32>
    %311 = arith.subf %300, %310 : vector<16x128xf32>
    %312 = arith.mulf %304, %304 : vector<16x1xf32>
    %313 = arith.subf %309, %312 : vector<16x1xf32>
    %cst_117 = arith.constant 9.99999974E-6 : f32
    %314 = vector.broadcast %cst_117 : f32 to vector<16x1xf32>
    %315 = arith.addf %313, %314 : vector<16x1xf32>
    %316 = math.rsqrt %315 : vector<16x1xf32>
    %317 = vector.broadcast %316 : vector<16x1xf32> to vector<16x128xf32>
    %318 = arith.mulf %311, %317 : vector<16x128xf32>
    %319 = vector.broadcast %3 : vector<1x128xf32> to vector<16x128xf32>
    %320 = arith.mulf %318, %319 : vector<16x128xf32>
    %321 = vector.broadcast %4 : vector<1x128xf32> to vector<16x128xf32>
    %322 = arith.addf %320, %321 : vector<16x128xf32>
    %323 = arith.addf %290, %322 : vector<16x128xf32>
    %324 = vector.extract_strided_slice %323 {offsets = [0, 0], sizes = [16, 32], strides = [1, 1]} : vector<16x128xf32> to vector<16x32xf32>
    %325 = arith.negf %324 : vector<16x32xf32>
    %326 = math.exp %325 : vector<16x32xf32>
    %cst_118 = arith.constant 1.000000e+00 : f32
    %327 = vector.broadcast %cst_118 : f32 to vector<16x32xf32>
    %328 = arith.addf %327, %326 : vector<16x32xf32>
    %329 = arith.divf %327, %328 : vector<16x32xf32>
    %330 = vector.extract_strided_slice %323 {offsets = [0, 32], sizes = [16, 32], strides = [1, 1]} : vector<16x128xf32> to vector<16x32xf32>
    %331 = arith.negf %330 : vector<16x32xf32>
    %332 = math.exp %331 : vector<16x32xf32>
    %cst_119 = arith.constant 1.000000e+00 : f32
    %333 = vector.broadcast %cst_119 : f32 to vector<16x32xf32>
    %334 = arith.addf %333, %332 : vector<16x32xf32>
    %335 = arith.divf %333, %334 : vector<16x32xf32>
    %336 = vector.extract_strided_slice %323 {offsets = [0, 96], sizes = [16, 32], strides = [1, 1]} : vector<16x128xf32> to vector<16x32xf32>
    %337 = arith.negf %336 : vector<16x32xf32>
    %338 = math.exp %337 : vector<16x32xf32>
    %cst_120 = arith.constant 1.000000e+00 : f32
    %339 = vector.broadcast %cst_120 : f32 to vector<16x32xf32>
    %340 = arith.addf %339, %338 : vector<16x32xf32>
    %341 = arith.divf %339, %340 : vector<16x32xf32>
    %342 = vector.extract_strided_slice %323 {offsets = [0, 64], sizes = [16, 32], strides = [1, 1]} : vector<16x128xf32> to vector<16x32xf32>
    %343 = vector.extract_strided_slice %322 {offsets = [0, 64], sizes = [16, 32], strides = [1, 1]} : vector<16x128xf32> to vector<16x32xf32>
    %344 = arith.mulf %329, %343 : vector<16x32xf32>
    %345 = arith.subf %342, %344 : vector<16x32xf32>
    %346 = math.tanh %345 : vector<16x32xf32>
    %347 = arith.mulf %341, %296 : vector<16x32xf32>
    %cst_121 = arith.constant 1.000000e+00 : f32
    %348 = vector.broadcast %cst_121 : f32 to vector<16x32xf32>
    %349 = arith.subf %348, %341 : vector<16x32xf32>
    %350 = arith.mulf %349, %297 : vector<16x32xf32>
    %351 = arith.addf %347, %350 : vector<16x32xf32>
    %352 = arith.subf %351, %346 : vector<16x32xf32>
    %353 = arith.mulf %335, %352 : vector<16x32xf32>
    %354 = arith.addf %346, %353 : vector<16x32xf32>
    %cst_122 = arith.constant dense<0.000000e+00> : vector<16xf32>
    %355 = vector.multi_reduction <add>, %354, %cst_122 [1] : vector<16x32xf32> to vector<16xf32>
    %356 = vector.shape_cast %355 : vector<16xf32> to vector<16x1xf32>
    %cst_123 = arith.constant 3.125000e-02 : f32
    %357 = vector.broadcast %cst_123 : f32 to vector<16x1xf32>
    %358 = arith.mulf %356, %357 : vector<16x1xf32>
    %359 = arith.mulf %354, %354 : vector<16x32xf32>
    %cst_124 = arith.constant dense<0.000000e+00> : vector<16xf32>
    %360 = vector.multi_reduction <add>, %359, %cst_124 [1] : vector<16x32xf32> to vector<16xf32>
    %361 = vector.shape_cast %360 : vector<16xf32> to vector<16x1xf32>
    %cst_125 = arith.constant 3.125000e-02 : f32
    %362 = vector.broadcast %cst_125 : f32 to vector<16x1xf32>
    %363 = arith.mulf %361, %362 : vector<16x1xf32>
    %364 = vector.broadcast %358 : vector<16x1xf32> to vector<16x32xf32>
    %365 = arith.subf %354, %364 : vector<16x32xf32>
    %366 = arith.mulf %358, %358 : vector<16x1xf32>
    %367 = arith.subf %363, %366 : vector<16x1xf32>
    %cst_126 = arith.constant 9.99999974E-6 : f32
    %368 = vector.broadcast %cst_126 : f32 to vector<16x1xf32>
    %369 = arith.addf %367, %368 : vector<16x1xf32>
    %370 = math.rsqrt %369 : vector<16x1xf32>
    %371 = vector.broadcast %370 : vector<16x1xf32> to vector<16x32xf32>
    %372 = arith.mulf %365, %371 : vector<16x32xf32>
    %373 = vector.broadcast %5 : vector<1x32xf32> to vector<16x32xf32>
    %374 = arith.mulf %372, %373 : vector<16x32xf32>
    %375 = vector.broadcast %6 : vector<1x32xf32> to vector<16x32xf32>
    %376 = arith.addf %374, %375 : vector<16x32xf32>
    %377 = vector.broadcast %295 : vector<16x1xf32> to vector<16x32xf32>
    %378 = arith.mulf %376, %377 : vector<16x32xf32>
    %c2_127 = arith.constant 2 : index
    %c0_128 = arith.constant 0 : index
    %379 = vector.load %arg7[%c2_127, %c0_128] : memref<18x32xf32, #tpu.memory_space<vmem>>, vector<16x32xf32>
    tpu.vector_store %arg7[%c2_127, %c0_128], %378 {strides = array<i32>} : memref<18x32xf32, #tpu.memory_space<vmem>>, vector<16x32xf32>,
    %c3_129 = arith.constant 3 : index
    %c0_130 = arith.constant 0 : index
    %c0_131 = arith.constant 0 : index
    %380 = vector.load %arg6[%c3_129, %c0_130, %c0_131] : memref<4x16x32xf32, #tpu.memory_space<vmem>>, vector<1x16x32xf32>
    %381 = vector.shape_cast %380 : vector<1x16x32xf32> to vector<16x32xf32>
    %382 = vector.shape_cast %378 : vector<16x32xf32> to vector<1x16x32xf32>
    tpu.vector_store %arg6[%c3_129, %c0_130, %c0_131], %382 {strides = array<i32>} : memref<4x16x32xf32, #tpu.memory_space<vmem>>, vector<1x16x32xf32>,
    return
  }
  func.func @transform_0(%arg0: i32) -> (i32, i32, i32) {
    %c0_i32 = arith.constant 0 : i32
    %c0_i32_0 = arith.constant 0 : i32
    %c0_i32_1 = arith.constant 0 : i32
    return %arg0, %c0_i32, %c0_i32_0 : i32, i32, i32
  }
  func.func @transform_1(%arg0: i32) -> (i32, i32, i32) {
    %c0_i32 = arith.constant 0 : i32
    %c0_i32_0 = arith.constant 0 : i32
    %c0_i32_1 = arith.constant 0 : i32
    %c0_i32_2 = arith.constant 0 : i32
    return %c0_i32, %c0_i32_0, %c0_i32_1 : i32, i32, i32
  }
  func.func @transform_2(%arg0: i32) -> (i32, i32) {
    %c0_i32 = arith.constant 0 : i32
    %c0_i32_0 = arith.constant 0 : i32
    %c0_i32_1 = arith.constant 0 : i32
    return %c0_i32, %c0_i32_0 : i32, i32
  }
  func.func @transform_3(%arg0: i32) -> (i32, i32) {
    %c0_i32 = arith.constant 0 : i32
    %c0_i32_0 = arith.constant 0 : i32
    %c0_i32_1 = arith.constant 0 : i32
    return %c0_i32, %c0_i32_0 : i32, i32
  }
  func.func @transform_4(%arg0: i32) -> (i32, i32) {
    %c0_i32 = arith.constant 0 : i32
    %c0_i32_0 = arith.constant 0 : i32
    %c0_i32_1 = arith.constant 0 : i32
    return %c0_i32, %c0_i32_0 : i32, i32
  }
  func.func @transform_5(%arg0: i32) -> (i32, i32, i32) {
    %c0_i32 = arith.constant 0 : i32
    %c0_i32_0 = arith.constant 0 : i32
    %c0_i32_1 = arith.constant 0 : i32
    return %arg0, %c0_i32, %c0_i32_0 : i32, i32, i32
  }
}

</mosaic_0001>

<llo_original>
// kernel: gru2d_layer.1
$region0: #{gru2d_layer.1}
  #allocation0 [shape = 'u32[]', space=smem, size = 0x4, offset = 0x4, fixed_abs, tag = 'smem constant byte address 0x4 - core index']
  #allocation1 [shape = 'u32[72,128]{1,0:T(1,128)}', space=vmem, size = 0x9000, scoped, tag = 'internal scratch']
  #allocation2 [shape = 'f32[18,32]{1,0:T(8,128)}', space=vmem, size = 0x3000, scoped, tag = 'scratch operand']
  %s0 = inlined_call_operand.vmem [shape: f32[16,16,128], index: 0, kind: input, shape index: {}]
  %s1 = inlined_call_operand.vmem [shape: f32[16,16,1], index: 1, kind: input, shape index: {}]
  %s2 = inlined_call_operand.vmem [shape: f32[64,128], index: 2, kind: input, shape index: {}]
  %s3 = inlined_call_operand.vmem [shape: f32[2,128], index: 3, kind: input, shape index: {}]
  %s4 = inlined_call_operand.vmem [shape: f32[2,32], index: 4, kind: input, shape index: {}]
  %s5 = inlined_call_operand.vmem [shape: f32[16,16,32], index: 5, kind: output, shape index: {}]
  %s6 = sld [smem:[#allocation0]]
  $region57: #{gru2d_layer.1} parent=0
    _
  %s8 = ssub.s32 1, %s6
  %s9 = scalar_select 0, %s8, %s6
  loop: start=0, step=1, limit=6
  $region2: #{gru2d_layer.1} parent=0 // loop_pre_header
    _
  $region3: #{gru2d_layer.1} parent=0 // loop_header
    %s11 = sphi 0, %s15
    %p12 = scmp.ge.s32.totalorder %s11, 6
    %s21 = sphi 0, %s23
    %s24 = sphi 0, %s21
    %s25 = sphi 0, %s24
    %s41 = sphi 0, %s25
    %s45 = sphi 0, %s45
    %s47 = sphi 0, %s45
    %s48 = sphi 0, %s47
    %s62 = sphi 0, %s48
    %s66 = sphi 0, %s66
    %s68 = sphi 0, %s66
    %s69 = sphi 0, %s68
    %s83 = sphi 0, %s69
    %s87 = sphi 0, %s87
    %s89 = sphi 0, %s87
    %s90 = sphi 0, %s89
    %s104 = sphi 0, %s90
    %s108 = sphi 0, %s108
    %s110 = sphi 0, %s108
    %s111 = sphi 0, %s110
    %s125 = sphi 0, %s111
    %s131 = sphi 0, %s133
    %s134 = sphi 0, %s131
    %s135 = sphi 0, %s134
    %s151 = sphi 0, %s135
  $region4: #{gru2d_layer.1} parent=0 // loop_header_branch
    %14 = sbr.rel (%p12) target = $region8
  $region5: #{gru2d_layer.1} parent=0 // loop_body
    %s16 = ssub.s32 %s11, 1
    %s17 = ssub.s32 %s11, 2
    %s18 = sadd.s32 %s11, 1
    %s19 = ssub.s32 %s11, %s18
    %p20 = scmp.eq.s32.totalorder %s19, 0
    %s22 = sadd.s32 %s21, 1
    %s23 = scalar_select %p20, %s21, %s22
    %p26 = pneg %p20
    %p27 = scmp.eq.s32.totalorder %s11, 3
    %p28 = por %p26, %p27
    %p29 = scmp.ne.s32.totalorder %s21, %s24
    %p30 = scmp.eq.s32.totalorder %s11, 0
    %p31 = por %p29, %p30
    %p32 = scmp.ne.s32.totalorder %s21, %s24
    %p33 = scmp.eq.s32.totalorder %s16, 3
    %p34 = por %p32, %p33
    %p35 = scmp.ne.s32.totalorder %s24, %s25
    %p36 = scmp.eq.s32.totalorder %s16, 0
    %p37 = por %p35, %p36
    %p38 = scmp.ne.s32.totalorder %s24, %s25
    %p39 = scmp.eq.s32.totalorder %s17, 3
    %p40 = por %p38, %p39
    %p42 = scmp.ne.s32.totalorder %s25, %s41
    %p43 = scmp.eq.s32.totalorder %s17, 0
    %p44 = por %p42, %p43
    %s46 = sadd.s32 %s45, 1
    %p49 = scmp.eq.s32.totalorder %s11, 3
    %p50 = scmp.ne.s32.totalorder %s45, %s47
    %p51 = scmp.eq.s32.totalorder %s11, 0
    %p52 = por %p50, %p51
    %p53 = scmp.ne.s32.totalorder %s45, %s47
    %p54 = scmp.eq.s32.totalorder %s16, 3
    %p55 = por %p53, %p54
    %p56 = scmp.ne.s32.totalorder %s47, %s48
    %p57 = scmp.eq.s32.totalorder %s16, 0
    %p58 = por %p56, %p57
    %p59 = scmp.ne.s32.totalorder %s47, %s48
    %p60 = scmp.eq.s32.totalorder %s17, 3
    %p61 = por %p59, %p60
    %p63 = scmp.ne.s32.totalorder %s48, %s62
    %p64 = scmp.eq.s32.totalorder %s17, 0
    %p65 = por %p63, %p64
    %s67 = sadd.s32 %s66, 1
    %p70 = scmp.eq.s32.totalorder %s11, 3
    %p71 = scmp.ne.s32.totalorder %s66, %s68
    %p72 = scmp.eq.s32.totalorder %s11, 0
    %p73 = por %p71, %p72
    %p74 = scmp.ne.s32.totalorder %s66, %s68
    %p75 = scmp.eq.s32.totalorder %s16, 3
    %p76 = por %p74, %p75
    %p77 = scmp.ne.s32.totalorder %s68, %s69
    %p78 = scmp.eq.s32.totalorder %s16, 0
    %p79 = por %p77, %p78
    %p80 = scmp.ne.s32.totalorder %s68, %s69
    %p81 = scmp.eq.s32.totalorder %s17, 3
    %p82 = por %p80, %p81
    %p84 = scmp.ne.s32.totalorder %s69, %s83
    %p85 = scmp.eq.s32.totalorder %s17, 0
    %p86 = por %p84, %p85
    %s88 = sadd.s32 %s87, 1
    %p91 = scmp.eq.s32.totalorder %s11, 3
    %p92 = scmp.ne.s32.totalorder %s87, %s89
    %p93 = scmp.eq.s32.totalorder %s11, 0
    %p94 = por %p92, %p93
    %p95 = scmp.ne.s32.totalorder %s87, %s89
    %p96 = scmp.eq.s32.totalorder %s16, 3
    %p97 = por %p95, %p96
    %p98 = scmp.ne.s32.totalorder %s89, %s90
    %p99 = scmp.eq.s32.totalorder %s16, 0
    %p100 = por %p98, %p99
    %p101 = scmp.ne.s32.totalorder %s89, %s90
    %p102 = scmp.eq.s32.totalorder %s17, 3
    %p103 = por %p101, %p102
    %p105 = scmp.ne.s32.totalorder %s90, %s104
    %p106 = scmp.eq.s32.totalorder %s17, 0
    %p107 = por %p105, %p106
    %s109 = sadd.s32 %s108, 1
    %p112 = scmp.eq.s32.totalorder %s11, 3
    %p113 = scmp.ne.s32.totalorder %s108, %s110
    %p114 = scmp.eq.s32.totalorder %s11, 0
    %p115 = por %p113, %p114
    %p116 = scmp.ne.s32.totalorder %s108, %s110
    %p117 = scmp.eq.s32.totalorder %s16, 3
    %p118 = por %p116, %p117
    %p119 = scmp.ne.s32.totalorder %s110, %s111
    %p120 = scmp.eq.s32.totalorder %s16, 0
    %p121 = por %p119, %p120
    %p122 = scmp.ne.s32.totalorder %s110, %s111
    %p123 = scmp.eq.s32.totalorder %s17, 3
    %p124 = por %p122, %p123
    %p126 = scmp.ne.s32.totalorder %s111, %s125
    %p127 = scmp.eq.s32.totalorder %s17, 0
    %p128 = por %p126, %p127
    %s129 = ssub.s32 %s11, %s18
    %p130 = scmp.eq.s32.totalorder %s129, 0
    %s132 = sadd.s32 %s131, 1
    %s133 = scalar_select %p130, %s131, %s132
    %p136 = pneg %p130
    %p137 = scmp.eq.s32.totalorder %s11, 3
    %p138 = por %p136, %p137
    %p139 = scmp.ne.s32.totalorder %s131, %s134
    %p140 = scmp.eq.s32.totalorder %s11, 0
    %p141 = por %p139, %p140
    %p142 = scmp.ne.s32.totalorder %s131, %s134
    %p143 = scmp.eq.s32.totalorder %s16, 3
    %p144 = por %p142, %p143
    %p145 = scmp.ne.s32.totalorder %s134, %s135
    %p146 = scmp.eq.s32.totalorder %s16, 0
    %p147 = por %p145, %p146
    %p148 = scmp.ne.s32.totalorder %s134, %s135
    %p149 = scmp.eq.s32.totalorder %s17, 3
    %p150 = por %p148, %p149
    %p152 = scmp.ne.s32.totalorder %s135, %s151
    %p153 = scmp.eq.s32.totalorder %s17, 0
    %p154 = por %p152, %p153
    %p155 = scmp.le.s32.totalorder 1, %s11
    %p156 = scmp.lt.s32.totalorder %s11, 5
    %p157 = pnand %p155, %p156
    %p158 = pneg %p157
    // Predicated region
    $region9: #{gru2d_layer.1} parent=5 // pred_check
      _
    $region10: #{gru2d_layer.1} parent=5 // pred_check_branch
      %160 = sbr.rel (%p157) target = $region12
    $region11: #{gru2d_layer.1} parent=5 // pred_region
      %s161 = ssub.s32 %s11, 1
      // Predicated region
      $region13: #{gru2d_layer.1} parent=11 // pred_check
        %p162 = pneg %p58
      $region14: #{gru2d_layer.1} parent=11 // pred_check_branch
        %164 = sbr.rel (%p162) target = $region16
      $region15: #{gru2d_layer.1} parent=11 // pred_region
        _
      $region16: #{gru2d_layer.1} parent=11 // pred_fallthru
        _
      // Predicated region
      $region17: #{gru2d_layer.1} parent=11 // pred_check
        %p165 = pneg %p79
      $region18: #{gru2d_layer.1} parent=11 // pred_check_branch
        %167 = sbr.rel (%p165) target = $region20
      $region19: #{gru2d_layer.1} parent=11 // pred_region
        _
      $region20: #{gru2d_layer.1} parent=11 // pred_fallthru
        _
      // Predicated region
      $region21: #{gru2d_layer.1} parent=11 // pred_check
        %p168 = pneg %p100
      $region22: #{gru2d_layer.1} parent=11 // pred_check_branch
        %170 = sbr.rel (%p168) target = $region24
      $region23: #{gru2d_layer.1} parent=11 // pred_region
        _
      $region24: #{gru2d_layer.1} parent=11 // pred_fallthru
        _
      // Predicated region
      $region25: #{gru2d_layer.1} parent=11 // pred_check
        %p171 = pneg %p121
      $region26: #{gru2d_layer.1} parent=11 // pred_check_branch
        %173 = sbr.rel (%p171) target = $region28
      $region27: #{gru2d_layer.1} parent=11 // pred_region
        _
      $region28: #{gru2d_layer.1} parent=11 // pred_fallthru
        _
    $region12: #{gru2d_layer.1} parent=5 // pred_fallthru
      _
    %p174 = scmp.lt.s32.totalorder %s11, 4
    // Predicated region
    $region29: #{gru2d_layer.1} parent=5 // pred_check
      %p175 = pneg %p174
    $region30: #{gru2d_layer.1} parent=5 // pred_check_branch
      %177 = sbr.rel (%p175) target = $region32
    $region31: #{gru2d_layer.1} parent=5 // pred_region
      // Predicated region
      $region33: #{gru2d_layer.1} parent=31 // pred_check
        %p178 = pneg %p31
      $region34: #{gru2d_layer.1} parent=31 // pred_check_branch
        %180 = sbr.rel (%p178) target = $region36
      $region35: #{gru2d_layer.1} parent=31 // pred_region
        %s181 = smul.u32 4, %s11
        %p182 = scmp.lt.s32.totalorder %s181, 15
        %s183 = scalar_select %p182, %s181, 15
        %s184 = smul.addr %s183, 2
        %s185 = smul.addr %s184, 8
        %s186 = scalar_lea.vmem %s0, %s185
        %s187 = smul.u32 4, %s11
      $region36: #{gru2d_layer.1} parent=31 // pred_fallthru
        _
    $region32: #{gru2d_layer.1} parent=5 // pred_fallthru
      _
    %p188 = scmp.le.s32.totalorder 1, %s11
    %p189 = scmp.lt.s32.totalorder %s11, 5
    %p190 = pnand %p188, %p189
    %p191 = pneg %p190
    // Predicated region
    $region37: #{gru2d_layer.1} parent=5 // pred_check
      _
    $region38: #{gru2d_layer.1} parent=5 // pred_check_branch
      %193 = sbr.rel (%p190) target = $region40
    $region39: #{gru2d_layer.1} parent=5 // pred_region
      %s194 = ssub.s32 %s11, 1
      %s195 = smul.u32 4, %s16
      %p196 = scmp.lt.s32.totalorder %s195, 15
      %s197 = scalar_select %p196, %s195, 15
      %s198 = smul.addr %s197, 2
      %s199 = smul.addr %s198, 8
      %s200 = scalar_lea.vmem %s0, %s199
      %p201 = pneg %p37
      %p202 = pneg %p34
      %p203 = pneg %p58
      %p204 = pneg %p55
      %p205 = pneg %p79
      %p206 = pneg %p76
      %p207 = pneg %p100
      %p208 = pneg %p97
      %p209 = pneg %p121
      %p210 = pneg %p118
      %p211 = pneg %p147
      %p212 = pneg %p144
      %s213 = smul.u32 4, %s16
      %p214 = scmp.lt.s32.totalorder %s213, 15
      %s215 = scalar_select %p214, %s213, 15
      %s216 = smul.addr %s215, 2
      %s217 = smul.addr %s216, 8
      %s218 = scalar_lea.vmem %s5, %s217
      %s219 = smul.u32 4, %s16
      %p220 = scmp.lt.s32.totalorder %s219, 15
      %s221 = scalar_select %p220, %s219, 15
      %s222 = smul.addr %s221, 2
      %s223 = smul.addr %s222, 8
      %s224 = scalar_lea.vmem %s0, %s223
      %s225 = smul.u32 4, %s16
      %s226 = smul.u32 4, %s16
      %p227 = scmp.lt.s32.totalorder %s226, 15
      %s228 = scalar_select %p227, %s226, 15
      %s229 = smul.addr %s228, 2
      %s230 = smul.addr %s229, 8
      %s231 = scalar_lea.vmem %s5, %s230
      %s232 = smul.u32 4, %s16
      %p233 = scmp.eq.s32.totalorder %s16, 0
      // Predicated region
      $region41: #{gru2d_layer.1} parent=39 // pred_check
        %p234 = pneg %p233
      $region42: #{gru2d_layer.1} parent=39 // pred_check_branch
        %236 = sbr.rel (%p234) target = $region44
      $region43: #{gru2d_layer.1} parent=39 // pred_region
        %vm237 = vcmask 261120
        %238 = vst.msk [vmem:[#allocation2] sm:$0xff] %vm237, 0.0
        %239 = vst.msk [vmem:[#allocation2 + $0x8] sm:$0xff] %vm237, 0.0
        %vm240 = vcmask 254976
        %241 = vst.msk [vmem:[#allocation2 + $0x10] sm:$0x3] %vm240, 0.0
      $region44: #{gru2d_layer.1} parent=39 // pred_fallthru
        _
      %v242 = vld [vmem:[%s3] sm:$0x1]
      %v243 = vld [vmem:[%s3 + $0x1] sm:$0x1]
      %v244 = vld [vmem:[%s4] sm:$0x1]
      %v245 = vld [vmem:[%s4 + $0x1] sm:$0x1]
      %v246 = vld [vmem:[%s224] sm:$0xff]
      %v247 = vld [vmem:[%s224 + $0x8] sm:$0xff]
      %s248 = smul.u32 %s16, 4
      %s249 = smul.u32 %s248, 16
      %s250 = scalar_lea.vmem %s1, %s249
      %v251 = vld [vmem:[%s250] sm:$0xff]
      %v252 = vld [vmem:[%s250 + $0x8] sm:$0xff]
      %v253 = vld [vmem:[#allocation2 + $0x2] sm:$0xff]
      %v254 = vld [vmem:[#allocation2 + $0xa] sm:$0xff]
      %v255 = vld [vmem:[#allocation2] sm:$0xff]
      %v256 = vld [vmem:[#allocation2 + $0x8] sm:$0xff]
      %259 = vrot.lane.b32.xlu0 %v255, 32
      %v260 = vpop.permute.xlu0 %259
      %261 = vrot.lane.b32.xlu0 %v256, 32
      %v262 = vpop.permute.xlu0 %261
      %vm265 = vcmask 261120
      %v266 = vsel %vm265, %v253, %v260
      %v267 = vsel %vm265, %v254, %v262
      %v268 = vld [vmem:[%s2] sm:$0xff]
      %v269 = vld [vmem:[%s2 + $0x8] sm:$0xff]
      %v270 = vld [vmem:[%s2 + $0x10] sm:$0xff]
      %v271 = vld [vmem:[%s2 + $0x18] sm:$0xff]
      %v272 = vld [vmem:[%s2 + $0x20] sm:$0xff]
      %v273 = vld [vmem:[%s2 + $0x28] sm:$0xff]
      %v274 = vld [vmem:[%s2 + $0x30] sm:$0xff]
      %v275 = vld [vmem:[%s2 + $0x38] sm:$0xff]
      %vm276 = vcmask 523264
      %v278 = vsel %vm276, %v266, 0
      %v281 = vsel %vm276, %v267, 0
      %283 = vmatpush.msra.mxu0 0.0
      %284 = vmatpush.msra.mxu0 0.0
      %285 = vmatpush.msra.mxu0 0.0
      %286 = vmatpush.msra.mxu0 0.0
      %287 = vmatpush.msra.mxu0 0.0
      %288 = vmatpush.msra.mxu0 0.0
      %289 = vmatpush.msra.mxu0 0.0
      %290 = vmatpush.msra.mxu0 0.0
      %291 = vmatpush.msra.mxu0 %v275
      %292 = vmatpush.msra.mxu0 %v274
      %293 = vmatpush.msra.mxu0 %v273
      %294 = vmatpush.msra.mxu0 %v272
      %295 = vmatpush.msra.mxu0 %v271
      %296 = vmatpush.msra.mxu0 %v270
      %297 = vmatpush.msra.mxu0 %v269
      %298 = vmatpush.msra.mxu0 %v268
      %299 = vmatmul.f32.gmra.mxu0 %v278
      %v300 = vpop.f32.mrf.mxu0
      %v301 = vadd.f32 0.0, %v300
      %302 = vmatmul.f32.gmra.mxu0 %v281
      %v303 = vpop.f32.mrf.mxu0
      %v304 = vadd.f32 0.0, %v303
      %305 = vdwg.mxu0
      %306 = vadd.xlane.f32.xlu0 %v301
      %v307 = vpop.xlane.xlu0 %306
      %308 = vadd.xlane.f32.xlu0 %v304
      %v309 = vpop.xlane.xlu0 %308
      %v310 = vmul.f32 %v307, 0.0078125
      %v311 = vmul.f32 %v309, 0.0078125
      %v312 = vmul.f32 %v301, %v301
      %v313 = vmul.f32 %v304, %v304
      %314 = vadd.xlane.f32.xlu0 %v312
      %v315 = vpop.xlane.xlu0 %314
      %316 = vadd.xlane.f32.xlu0 %v313
      %v317 = vpop.xlane.xlu0 %316
      %v318 = vmul.f32 %v315, 0.0078125
      %v319 = vmul.f32 %v317, 0.0078125
      %v320 = vsub.f32 %v301, %v310
      %v321 = vsub.f32 %v304, %v311
      %v322 = vmul.f32 %v310, %v310
      %v323 = vmul.f32 %v311, %v311
      %v324 = vsub.f32 %v318, %v322
      %v325 = vsub.f32 %v319, %v323
      %v326 = vadd.f32 %v324, 1e-05
      %v327 = vadd.f32 %v325, 1e-05
      %v328 = vrsqrt.pop %v326
      %v329 = vmul.f32 %v328, %v326
      %v330 = vmul.f32 %v329, %v328
      %v331 = vmul.f32 0.5, %v330
      %v332 = vsub.f32 1.5, %v331
      %v333 = vmul.f32 %v328, %v332
      %vm334 = vweird.f32 %v326
      %vm335 = vweird.f32 %v328
      %vm336 = vmor %vm334, %vm335
      %v337 = vsel %vm336, %v328, %v333
      %v338 = vrsqrt.pop %v327
      %v339 = vmul.f32 %v338, %v327
      %v340 = vmul.f32 %v339, %v338
      %v341 = vmul.f32 0.5, %v340
      %v342 = vsub.f32 1.5, %v341
      %v343 = vmul.f32 %v338, %v342
      %vm344 = vweird.f32 %v327
      %vm345 = vweird.f32 %v338
      %vm346 = vmor %vm344, %vm345
      %v347 = vsel %vm346, %v338, %v343
      %v348 = vmul.f32 %v320, %v337
      %v349 = vmul.f32 %v321, %v347
      %v350 = vperm.slane %v242, 0
      %v351 = vmul.f32 %v348, %v350
      %v352 = vmul.f32 %v349, %v350
      %v353 = vperm.slane %v243, 0
      %v354 = vadd.f32 %v351, %v353
      %v355 = vadd.f32 %v352, %v353
      %v356 = vadd.f32 %v246, %v354
      %v357 = vadd.f32 %v247, %v355
      %v358 = vxor.u32 %v356, 2147483648
      %v359 = vxor.u32 %v357, 2147483648
      %v360 = vmul.f32 %v358, 1.442695
      %v361 = vpow.pop %v360
      %v362 = vmul.f32 %v359, 1.442695
      %v363 = vpow.pop %v362
      %v364 = vadd.f32 %v361, 1.0
      %v365 = vadd.f32 %v363, 1.0
      %v366 = vrcp.pop %v364
      %v367 = vmul.f32 %v364, %v366
      %v368 = vsub.f32 1.0, %v367
      %v369 = vmul.f32 %v366, %v368
      %v370 = vadd.f32 %v366, %v369
      %vm371 = vweird.f32 %v364
      %vm372 = vweird.f32 %v366
      %vm373 = vmor %vm371, %vm372
      %v374 = vsel %vm373, %v366, %v370
      %v375 = vand.u32 2147483647, %v364
      %vm376 = vcmp.eq.f32.partialorder %v375, 8.507059e+37
      %v377 = vand.u32 %v364, 2147483648
      %v378 = vor.u32 1.1754944e-38, %v377
      %v379 = vsel %vm376, %v378, %v374
      %v380 = vmul.f32 1.0, %v379
      %v381 = vrcp.pop %v365
      %v382 = vmul.f32 %v365, %v381
      %v383 = vsub.f32 1.0, %v382
      %v384 = vmul.f32 %v381, %v383
      %v385 = vadd.f32 %v381, %v384
      %vm386 = vweird.f32 %v365
      %vm387 = vweird.f32 %v381
      %vm388 = vmor %vm386, %vm387
      %v389 = vsel %vm388, %v381, %v385
      %v390 = vand.u32 2147483647, %v365
      %vm391 = vcmp.eq.f32.partialorder %v390, 8.507059e+37
      %v392 = vand.u32 %v365, 2147483648
      %v393 = vor.u32 1.1754944e-38, %v392
      %v394 = vsel %vm391, %v393, %v389
      %v395 = vmul.f32 1.0, %v394
      %398 = vrot.lane.b32.xlu0 %v354, 64
      %v399 = vpop.permute.xlu0 %398
      %400 = vrot.lane.b32.xlu0 %v355, 64
      %v401 = vpop.permute.xlu0 %400
      %v404 = vmul.f32 %v380, %v399
      %v405 = vmul.f32 %v395, %v401
      %408 = vrot.lane.b32.xlu0 %v404, 64
      %v409 = vpop.permute.xlu0 %408
      %410 = vrot.lane.b32.xlu0 %v405, 64
      %v411 = vpop.permute.xlu0 %410
      %v414 = vsub.f32 %v356, %v409
      %v415 = vsub.f32 %v357, %v411
      %v416 = vtanh.pop %v414
      %v417 = vtanh.pop %v415
      %420 = vrot.lane.b32.xlu0 %v253, 96
      %v421 = vpop.permute.xlu0 %420
      %422 = vrot.lane.b32.xlu0 %v254, 96
      %v423 = vpop.permute.xlu0 %422
      %v426 = vmul.f32 %v380, %v421
      %v427 = vmul.f32 %v395, %v423
      %v428 = vsub.f32 1.0, %v380
      %v429 = vsub.f32 1.0, %v395
      %430 = vrot.lane.b32.xlu0 %v255, 96
      %v431 = vpop.permute.xlu0 %430
      %432 = vrot.lane.b32.xlu0 %v256, 96
      %v433 = vpop.permute.xlu0 %432
      %v436 = vmul.f32 %v428, %v431
      %v437 = vmul.f32 %v429, %v433
      %v438 = vadd.f32 %v426, %v436
      %v439 = vadd.f32 %v427, %v437
      %442 = vrot.lane.b32.xlu0 %v416, 32
      %v443 = vpop.permute.xlu0 %442
      %444 = vrot.lane.b32.xlu0 %v417, 32
      %v445 = vpop.permute.xlu0 %444
      %v448 = vsub.f32 %v438, %v443
      %v449 = vsub.f32 %v439, %v445
      %452 = vrot.lane.b32.xlu0 %v448, 64
      %v453 = vpop.permute.xlu0 %452
      %454 = vrot.lane.b32.xlu0 %v449, 64
      %v455 = vpop.permute.xlu0 %454
      %v458 = vmul.f32 %v380, %v453
      %v459 = vmul.f32 %v395, %v455
      %462 = vrot.lane.b32.xlu0 %v458, 32
      %v463 = vpop.permute.xlu0 %462
      %464 = vrot.lane.b32.xlu0 %v459, 32
      %v465 = vpop.permute.xlu0 %464
      %v468 = vadd.f32 %v416, %v463
      %v469 = vadd.f32 %v417, %v465
      %472 = vrot.lane.b32.xlu0 %v468, 64
      %v473 = vpop.permute.xlu0 %472
      %474 = vrot.lane.b32.xlu0 %v469, 64
      %v475 = vpop.permute.xlu0 %474
      %v478 = vsel %vm265, %v473, 0.0
      %479 = vadd.xlane.f32.xlu0 %v478
      %v480 = vpop.xlane.xlu0 %479
      %v481 = vsel %vm265, %v475, 0.0
      %482 = vadd.xlane.f32.xlu0 %v481
      %v483 = vpop.xlane.xlu0 %482
      %v484 = vmul.f32 %v480, 0.03125
      %v485 = vmul.f32 %v483, 0.03125
      %v486 = vmul.f32 %v468, %v468
      %v487 = vmul.f32 %v469, %v469
      %490 = vrot.lane.b32.xlu0 %v486, 64
      %v491 = vpop.permute.xlu0 %490
      %492 = vrot.lane.b32.xlu0 %v487, 64
      %v493 = vpop.permute.xlu0 %492
      %v496 = vsel %vm265, %v491, 0.0
      %497 = vadd.xlane.f32.xlu0 %v496
      %v498 = vpop.xlane.xlu0 %497
      %v499 = vsel %vm265, %v493, 0.0
      %500 = vadd.xlane.f32.xlu0 %v499
      %v501 = vpop.xlane.xlu0 %500
      %v502 = vmul.f32 %v498, 0.03125
      %v503 = vmul.f32 %v501, 0.03125
      %v504 = vsub.f32 %v468, %v484
      %v505 = vsub.f32 %v469, %v485
      %v506 = vmul.f32 %v484, %v484
      %v507 = vmul.f32 %v485, %v485
      %v508 = vsub.f32 %v502, %v506
      %v509 = vsub.f32 %v503, %v507
      %v510 = vadd.f32 %v508, 1e-05
      %v511 = vadd.f32 %v509, 1e-05
      %v512 = vrsqrt.pop %v510
      %v513 = vmul.f32 %v512, %v510
      %v514 = vmul.f32 %v513, %v512
      %v515 = vmul.f32 0.5, %v514
      %v516 = vsub.f32 1.5, %v515
      %v517 = vmul.f32 %v512, %v516
      %vm518 = vweird.f32 %v510
      %vm519 = vweird.f32 %v512
      %vm520 = vmor %vm518, %vm519
      %v521 = vsel %vm520, %v512, %v517
      %v522 = vrsqrt.pop %v511
      %v523 = vmul.f32 %v522, %v511
      %v524 = vmul.f32 %v523, %v522
      %v525 = vmul.f32 0.5, %v524
      %v526 = vsub.f32 1.5, %v525
      %v527 = vmul.f32 %v522, %v526
      %vm528 = vweird.f32 %v511
      %vm529 = vweird.f32 %v522
      %vm530 = vmor %vm528, %vm529
      %v531 = vsel %vm530, %v522, %v527
      %v532 = vmul.f32 %v504, %v521
      %v533 = vmul.f32 %v505, %v531
      %v534 = vperm.slane %v244, 0
      %536 = vrot.lane.b32.xlu0 %v534, 64
      %v537 = vpop.permute.xlu0 %536
      %v539 = vmul.f32 %v532, %v537
      %v540 = vmul.f32 %v533, %v537
      %v541 = vperm.slane %v245, 0
      %543 = vrot.lane.b32.xlu0 %v541, 64
      %v544 = vpop.permute.xlu0 %543
      %v546 = vadd.f32 %v539, %v544
      %v547 = vadd.f32 %v540, %v544
      %549 = vset.pattern.permute.xlu0 0
      %550 = vperm.xlu0 %549, %v251
      %v551 = vpop.permute.xlu0 %550
      %554 = vset.pattern.permute.xlu0 0
      %555 = vperm.xlu0 %554, %v252
      %v556 = vpop.permute.xlu0 %555
      %v558 = vmul.f32 %v546, %v551
      %v559 = vmul.f32 %v547, %v556
      %562 = vrot.lane.b32.xlu0 %v558, 64
      %v563 = vpop.permute.xlu0 %562
      %564 = vrot.lane.b32.xlu0 %v559, 64
      %v565 = vpop.permute.xlu0 %564
      %568 = vst.msk [vmem:[#allocation2 + $0x2] sm:$0xff] %vm265, %v563
      %569 = vst.msk [vmem:[#allocation2 + $0xa] sm:$0xff] %vm265, %v565
      %570 = vst.msk [vmem:[%s231] sm:$0xff] %vm265, %v563
      %571 = vst.msk [vmem:[%s231 + $0x8] sm:$0xff] %vm265, %v565
      %s572 = scalar_lea.vmem %s224, 16
      %v573 = vld [vmem:[%s572] sm:$0xff]
      %v574 = vld [vmem:[%s572 + $0x8] sm:$0xff]
      %s575 = sadd.s32 %s248, 1
      %s576 = smul.u32 %s575, 16
      %s577 = scalar_lea.vmem %s1, %s576
      %v578 = vld [vmem:[%s577] sm:$0xff]
      %v579 = vld [vmem:[%s577 + $0x8] sm:$0xff]
      %v580 = vld [vmem:[#allocation2 + $0x2] sm:$0xff]
      %v581 = vld [vmem:[#allocation2 + $0xa] sm:$0xff]
      %v582 = vld [vmem:[#allocation2] sm:$0xff]
      %v583 = vld [vmem:[#allocation2 + $0x8] sm:$0xff]
      %586 = vrot.lane.b32.xlu0 %v582, 32
      %v587 = vpop.permute.xlu0 %586
      %588 = vrot.lane.b32.xlu0 %v583, 32
      %v589 = vpop.permute.xlu0 %588
      %v592 = vsel %vm265, %v580, %v587
      %v593 = vsel %vm265, %v581, %v589
      %v594 = vld [vmem:[%s2] sm:$0xff]
      %v595 = vld [vmem:[%s2 + $0x8] sm:$0xff]
      %v596 = vld [vmem:[%s2 + $0x10] sm:$0xff]
      %v597 = vld [vmem:[%s2 + $0x18] sm:$0xff]
      %v598 = vld [vmem:[%s2 + $0x20] sm:$0xff]
      %v599 = vld [vmem:[%s2 + $0x28] sm:$0xff]
      %v600 = vld [vmem:[%s2 + $0x30] sm:$0xff]
      %v601 = vld [vmem:[%s2 + $0x38] sm:$0xff]
      %v603 = vsel %vm276, %v592, 0
      %v606 = vsel %vm276, %v593, 0
      %608 = vmatpush.msra.mxu0 0.0
      %609 = vmatpush.msra.mxu0 0.0
      %610 = vmatpush.msra.mxu0 0.0
      %611 = vmatpush.msra.mxu0 0.0
      %612 = vmatpush.msra.mxu0 0.0
      %613 = vmatpush.msra.mxu0 0.0
      %614 = vmatpush.msra.mxu0 0.0
      %615 = vmatpush.msra.mxu0 0.0
      %616 = vmatpush.msra.mxu0 %v601
      %617 = vmatpush.msra.mxu0 %v600
      %618 = vmatpush.msra.mxu0 %v599
      %619 = vmatpush.msra.mxu0 %v598
      %620 = vmatpush.msra.mxu0 %v597
      %621 = vmatpush.msra.mxu0 %v596
      %622 = vmatpush.msra.mxu0 %v595
      %623 = vmatpush.msra.mxu0 %v594
      %624 = vmatmul.f32.gmra.mxu0 %v603
      %v625 = vpop.f32.mrf.mxu0
      %v626 = vadd.f32 0.0, %v625
      %627 = vmatmul.f32.gmra.mxu0 %v606
      %v628 = vpop.f32.mrf.mxu0
      %v629 = vadd.f32 0.0, %v628
      %630 = vdwg.mxu0
      %631 = vadd.xlane.f32.xlu0 %v626
      %v632 = vpop.xlane.xlu0 %631
      %633 = vadd.xlane.f32.xlu0 %v629
      %v634 = vpop.xlane.xlu0 %633
      %v635 = vmul.f32 %v632, 0.0078125
      %v636 = vmul.f32 %v634, 0.0078125
      %v637 = vmul.f32 %v626, %v626
      %v638 = vmul.f32 %v629, %v629
      %639 = vadd.xlane.f32.xlu0 %v637
      %v640 = vpop.xlane.xlu0 %639
      %641 = vadd.xlane.f32.xlu0 %v638
      %v642 = vpop.xlane.xlu0 %641
      %v643 = vmul.f32 %v640, 0.0078125
      %v644 = vmul.f32 %v642, 0.0078125
      %v645 = vsub.f32 %v626, %v635
      %v646 = vsub.f32 %v629, %v636
      %v647 = vmul.f32 %v635, %v635
      %v648 = vmul.f32 %v636, %v636
      %v649 = vsub.f32 %v643, %v647
      %v650 = vsub.f32 %v644, %v648
      %v651 = vadd.f32 %v649, 1e-05
      %v652 = vadd.f32 %v650, 1e-05
      %v653 = vrsqrt.pop %v651
      %v654 = vmul.f32 %v653, %v651
      %v655 = vmul.f32 %v654, %v653
      %v656 = vmul.f32 0.5, %v655
      %v657 = vsub.f32 1.5, %v656
      %v658 = vmul.f32 %v653, %v657
      %vm659 = vweird.f32 %v651
      %vm660 = vweird.f32 %v653
      %vm661 = vmor %vm659, %vm660
      %v662 = vsel %vm661, %v653, %v658
      %v663 = vrsqrt.pop %v652
      %v664 = vmul.f32 %v663, %v652
      %v665 = vmul.f32 %v664, %v663
      %v666 = vmul.f32 0.5, %v665
      %v667 = vsub.f32 1.5, %v666
      %v668 = vmul.f32 %v663, %v667
      %vm669 = vweird.f32 %v652
      %vm670 = vweird.f32 %v663
      %vm671 = vmor %vm669, %vm670
      %v672 = vsel %vm671, %v663, %v668
      %v673 = vmul.f32 %v645, %v662
      %v674 = vmul.f32 %v646, %v672
      %v675 = vmul.f32 %v673, %v350
      %v676 = vmul.f32 %v674, %v350
      %v677 = vadd.f32 %v675, %v353
      %v678 = vadd.f32 %v676, %v353
      %v679 = vadd.f32 %v573, %v677
      %v680 = vadd.f32 %v574, %v678
      %v681 = vxor.u32 %v679, 2147483648
      %v682 = vxor.u32 %v680, 2147483648
      %v683 = vmul.f32 %v681, 1.442695
      %v684 = vpow.pop %v683
      %v685 = vmul.f32 %v682, 1.442695
      %v686 = vpow.pop %v685
      %v687 = vadd.f32 %v684, 1.0
      %v688 = vadd.f32 %v686, 1.0
      %v689 = vrcp.pop %v687
      %v690 = vmul.f32 %v687, %v689
      %v691 = vsub.f32 1.0, %v690
      %v692 = vmul.f32 %v689, %v691
      %v693 = vadd.f32 %v689, %v692
      %vm694 = vweird.f32 %v687
      %vm695 = vweird.f32 %v689
      %vm696 = vmor %vm694, %vm695
      %v697 = vsel %vm696, %v689, %v693
      %v698 = vand.u32 2147483647, %v687
      %vm699 = vcmp.eq.f32.partialorder %v698, 8.507059e+37
      %v700 = vand.u32 %v687, 2147483648
      %v701 = vor.u32 1.1754944e-38, %v700
      %v702 = vsel %vm699, %v701, %v697
      %v703 = vmul.f32 1.0, %v702
      %v704 = vrcp.pop %v688
      %v705 = vmul.f32 %v688, %v704
      %v706 = vsub.f32 1.0, %v705
      %v707 = vmul.f32 %v704, %v706
      %v708 = vadd.f32 %v704, %v707
      %vm709 = vweird.f32 %v688
      %vm710 = vweird.f32 %v704
      %vm711 = vmor %vm709, %vm710
      %v712 = vsel %vm711, %v704, %v708
      %v713 = vand.u32 2147483647, %v688
      %vm714 = vcmp.eq.f32.partialorder %v713, 8.507059e+37
      %v715 = vand.u32 %v688, 2147483648
      %v716 = vor.u32 1.1754944e-38, %v715
      %v717 = vsel %vm714, %v716, %v712
      %v718 = vmul.f32 1.0, %v717
      %721 = vrot.lane.b32.xlu0 %v677, 64
      %v722 = vpop.permute.xlu0 %721
      %723 = vrot.lane.b32.xlu0 %v678, 64
      %v724 = vpop.permute.xlu0 %723
      %v727 = vmul.f32 %v703, %v722
      %v728 = vmul.f32 %v718, %v724
      %731 = vrot.lane.b32.xlu0 %v727, 64
      %v732 = vpop.permute.xlu0 %731
      %733 = vrot.lane.b32.xlu0 %v728, 64
      %v734 = vpop.permute.xlu0 %733
      %v737 = vsub.f32 %v679, %v732
      %v738 = vsub.f32 %v680, %v734
      %v739 = vtanh.pop %v737
      %v740 = vtanh.pop %v738
      %743 = vrot.lane.b32.xlu0 %v580, 96
      %v744 = vpop.permute.xlu0 %743
      %745 = vrot.lane.b32.xlu0 %v581, 96
      %v746 = vpop.permute.xlu0 %745
      %v749 = vmul.f32 %v703, %v744
      %v750 = vmul.f32 %v718, %v746
      %v751 = vsub.f32 1.0, %v703
      %v752 = vsub.f32 1.0, %v718
      %753 = vrot.lane.b32.xlu0 %v582, 96
      %v754 = vpop.permute.xlu0 %753
      %755 = vrot.lane.b32.xlu0 %v583, 96
      %v756 = vpop.permute.xlu0 %755
      %v759 = vmul.f32 %v751, %v754
      %v760 = vmul.f32 %v752, %v756
      %v761 = vadd.f32 %v749, %v759
      %v762 = vadd.f32 %v750, %v760
      %765 = vrot.lane.b32.xlu0 %v739, 32
      %v766 = vpop.permute.xlu0 %765
      %767 = vrot.lane.b32.xlu0 %v740, 32
      %v768 = vpop.permute.xlu0 %767
      %v771 = vsub.f32 %v761, %v766
      %v772 = vsub.f32 %v762, %v768
      %775 = vrot.lane.b32.xlu0 %v771, 64
      %v776 = vpop.permute.xlu0 %775
      %777 = vrot.lane.b32.xlu0 %v772, 64
      %v778 = vpop.permute.xlu0 %777
      %v781 = vmul.f32 %v703, %v776
      %v782 = vmul.f32 %v718, %v778
      %785 = vrot.lane.b32.xlu0 %v781, 32
      %v786 = vpop.permute.xlu0 %785
      %787 = vrot.lane.b32.xlu0 %v782, 32
      %v788 = vpop.permute.xlu0 %787
      %v791 = vadd.f32 %v739, %v786
      %v792 = vadd.f32 %v740, %v788
      %795 = vrot.lane.b32.xlu0 %v791, 64
      %v796 = vpop.permute.xlu0 %795
      %797 = vrot.lane.b32.xlu0 %v792, 64
      %v798 = vpop.permute.xlu0 %797
      %v801 = vsel %vm265, %v796, 0.0
      %802 = vadd.xlane.f32.xlu0 %v801
      %v803 = vpop.xlane.xlu0 %802
      %v804 = vsel %vm265, %v798, 0.0
      %805 = vadd.xlane.f32.xlu0 %v804
      %v806 = vpop.xlane.xlu0 %805
      %v807 = vmul.f32 %v803, 0.03125
      %v808 = vmul.f32 %v806, 0.03125
      %v809 = vmul.f32 %v791, %v791
      %v810 = vmul.f32 %v792, %v792
      %813 = vrot.lane.b32.xlu0 %v809, 64
      %v814 = vpop.permute.xlu0 %813
      %815 = vrot.lane.b32.xlu0 %v810, 64
      %v816 = vpop.permute.xlu0 %815
      %v819 = vsel %vm265, %v814, 0.0
      %820 = vadd.xlane.f32.xlu0 %v819
      %v821 = vpop.xlane.xlu0 %820
      %v822 = vsel %vm265, %v816, 0.0
      %823 = vadd.xlane.f32.xlu0 %v822
      %v824 = vpop.xlane.xlu0 %823
      %v825 = vmul.f32 %v821, 0.03125
      %v826 = vmul.f32 %v824, 0.03125
      %v827 = vsub.f32 %v791, %v807
      %v828 = vsub.f32 %v792, %v808
      %v829 = vmul.f32 %v807, %v807
      %v830 = vmul.f32 %v808, %v808
      %v831 = vsub.f32 %v825, %v829
      %v832 = vsub.f32 %v826, %v830
      %v833 = vadd.f32 %v831, 1e-05
      %v834 = vadd.f32 %v832, 1e-05
      %v835 = vrsqrt.pop %v833
      %v836 = vmul.f32 %v835, %v833
      %v837 = vmul.f32 %v836, %v835
      %v838 = vmul.f32 0.5, %v837
      %v839 = vsub.f32 1.5, %v838
      %v840 = vmul.f32 %v835, %v839
      %vm841 = vweird.f32 %v833
      %vm842 = vweird.f32 %v835
      %vm843 = vmor %vm841, %vm842
      %v844 = vsel %vm843, %v835, %v840
      %v845 = vrsqrt.pop %v834
      %v846 = vmul.f32 %v845, %v834
      %v847 = vmul.f32 %v846, %v845
      %v848 = vmul.f32 0.5, %v847
      %v849 = vsub.f32 1.5, %v848
      %v850 = vmul.f32 %v845, %v849
      %vm851 = vweird.f32 %v834
      %vm852 = vweird.f32 %v845
      %vm853 = vmor %vm851, %vm852
      %v854 = vsel %vm853, %v845, %v850
      %v855 = vmul.f32 %v827, %v844
      %v856 = vmul.f32 %v828, %v854
      %v857 = vmul.f32 %v855, %v537
      %v858 = vmul.f32 %v856, %v537
      %v859 = vadd.f32 %v857, %v544
      %v860 = vadd.f32 %v858, %v544
      %862 = vset.pattern.permute.xlu0 0
      %863 = vperm.xlu0 %862, %v578
      %v864 = vpop.permute.xlu0 %863
      %867 = vset.pattern.permute.xlu0 0
      %868 = vperm.xlu0 %867, %v579
      %v869 = vpop.permute.xlu0 %868
      %v871 = vmul.f32 %v859, %v864
      %v872 = vmul.f32 %v860, %v869
      %875 = vrot.lane.b32.xlu0 %v871, 64
      %v876 = vpop.permute.xlu0 %875
      %877 = vrot.lane.b32.xlu0 %v872, 64
      %v878 = vpop.permute.xlu0 %877
      %881 = vst.msk [vmem:[#allocation2 + $0x2] sm:$0xff] %vm265, %v876
      %882 = vst.msk [vmem:[#allocation2 + $0xa] sm:$0xff] %vm265, %v878
      %s883 = scalar_lea.vmem %s231, 16
      %884 = vst.msk [vmem:[%s883] sm:$0xff] %vm265, %v876
      %885 = vst.msk [vmem:[%s883 + $0x8] sm:$0xff] %vm265, %v878
      %s886 = scalar_lea.vmem %s224, 32
      %v887 = vld [vmem:[%s886] sm:$0xff]
      %v888 = vld [vmem:[%s886 + $0x8] sm:$0xff]
      %s889 = sadd.s32 %s248, 2
      %s890 = smul.u32 %s889, 16
      %s891 = scalar_lea.vmem %s1, %s890
      %v892 = vld [vmem:[%s891] sm:$0xff]
      %v893 = vld [vmem:[%s891 + $0x8] sm:$0xff]
      %v894 = vld [vmem:[#allocation2 + $0x2] sm:$0xff]
      %v895 = vld [vmem:[#allocation2 + $0xa] sm:$0xff]
      %v896 = vld [vmem:[#allocation2] sm:$0xff]
      %v897 = vld [vmem:[#allocation2 + $0x8] sm:$0xff]
      %900 = vrot.lane.b32.xlu0 %v896, 32
      %v901 = vpop.permute.xlu0 %900
      %902 = vrot.lane.b32.xlu0 %v897, 32
      %v903 = vpop.permute.xlu0 %902
      %v906 = vsel %vm265, %v894, %v901
      %v907 = vsel %vm265, %v895, %v903
      %v908 = vld [vmem:[%s2] sm:$0xff]
      %v909 = vld [vmem:[%s2 + $0x8] sm:$0xff]
      %v910 = vld [vmem:[%s2 + $0x10] sm:$0xff]
      %v911 = vld [vmem:[%s2 + $0x18] sm:$0xff]
      %v912 = vld [vmem:[%s2 + $0x20] sm:$0xff]
      %v913 = vld [vmem:[%s2 + $0x28] sm:$0xff]
      %v914 = vld [vmem:[%s2 + $0x30] sm:$0xff]
      %v915 = vld [vmem:[%s2 + $0x38] sm:$0xff]
      %v917 = vsel %vm276, %v906, 0
      %v920 = vsel %vm276, %v907, 0
      %922 = vmatpush.msra.mxu0 0.0
      %923 = vmatpush.msra.mxu0 0.0
      %924 = vmatpush.msra.mxu0 0.0
      %925 = vmatpush.msra.mxu0 0.0
      %926 = vmatpush.msra.mxu0 0.0
      %927 = vmatpush.msra.mxu0 0.0
      %928 = vmatpush.msra.mxu0 0.0
      %929 = vmatpush.msra.mxu0 0.0
      %930 = vmatpush.msra.mxu0 %v915
      %931 = vmatpush.msra.mxu0 %v914
      %932 = vmatpush.msra.mxu0 %v913
      %933 = vmatpush.msra.mxu0 %v912
      %934 = vmatpush.msra.mxu0 %v911
      %935 = vmatpush.msra.mxu0 %v910
      %936 = vmatpush.msra.mxu0 %v909
      %937 = vmatpush.msra.mxu0 %v908
      %938 = vmatmul.f32.gmra.mxu0 %v917
      %v939 = vpop.f32.mrf.mxu0
      %v940 = vadd.f32 0.0, %v939
      %941 = vmatmul.f32.gmra.mxu0 %v920
      %v942 = vpop.f32.mrf.mxu0
      %v943 = vadd.f32 0.0, %v942
      %944 = vdwg.mxu0
      %945 = vadd.xlane.f32.xlu0 %v940
      %v946 = vpop.xlane.xlu0 %945
      %947 = vadd.xlane.f32.xlu0 %v943
      %v948 = vpop.xlane.xlu0 %947
      %v949 = vmul.f32 %v946, 0.0078125
      %v950 = vmul.f32 %v948, 0.0078125
      %v951 = vmul.f32 %v940, %v940
      %v952 = vmul.f32 %v943, %v943
      %953 = vadd.xlane.f32.xlu0 %v951
      %v954 = vpop.xlane.xlu0 %953
      %955 = vadd.xlane.f32.xlu0 %v952
      %v956 = vpop.xlane.xlu0 %955
      %v957 = vmul.f32 %v954, 0.0078125
      %v958 = vmul.f32 %v956, 0.0078125
      %v959 = vsub.f32 %v940, %v949
      %v960 = vsub.f32 %v943, %v950
      %v961 = vmul.f32 %v949, %v949
      %v962 = vmul.f32 %v950, %v950
      %v963 = vsub.f32 %v957, %v961
      %v964 = vsub.f32 %v958, %v962
      %v965 = vadd.f32 %v963, 1e-05
      %v966 = vadd.f32 %v964, 1e-05
      %v967 = vrsqrt.pop %v965
      %v968 = vmul.f32 %v967, %v965
      %v969 = vmul.f32 %v968, %v967
      %v970 = vmul.f32 0.5, %v969
      %v971 = vsub.f32 1.5, %v970
      %v972 = vmul.f32 %v967, %v971
      %vm973 = vweird.f32 %v965
      %vm974 = vweird.f32 %v967
      %vm975 = vmor %vm973, %vm974
      %v976 = vsel %vm975, %v967, %v972
      %v977 = vrsqrt.pop %v966
      %v978 = vmul.f32 %v977, %v966
      %v979 = vmul.f32 %v978, %v977
      %v980 = vmul.f32 0.5, %v979
      %v981 = vsub.f32 1.5, %v980
      %v982 = vmul.f32 %v977, %v981
      %vm983 = vweird.f32 %v966
      %vm984 = vweird.f32 %v977
      %vm985 = vmor %vm983, %vm984
      %v986 = vsel %vm985, %v977, %v982
      %v987 = vmul.f32 %v959, %v976
      %v988 = vmul.f32 %v960, %v986
      %v989 = vmul.f32 %v987, %v350
      %v990 = vmul.f32 %v988, %v350
      %v991 = vadd.f32 %v989, %v353
      %v992 = vadd.f32 %v990, %v353
      %v993 = vadd.f32 %v887, %v991
      %v994 = vadd.f32 %v888, %v992
      %v995 = vxor.u32 %v993, 2147483648
      %v996 = vxor.u32 %v994, 2147483648
      %v997 = vmul.f32 %v995, 1.442695
      %v998 = vpow.pop %v997
      %v999 = vmul.f32 %v996, 1.442695
      %v1000 = vpow.pop %v999
      %v1001 = vadd.f32 %v998, 1.0
      %v1002 = vadd.f32 %v1000, 1.0
      %v1003 = vrcp.pop %v1001
      %v1004 = vmul.f32 %v1001, %v1003
      %v1005 = vsub.f32 1.0, %v1004
      %v1006 = vmul.f32 %v1003, %v1005
      %v1007 = vadd.f32 %v1003, %v1006
      %vm1008 = vweird.f32 %v1001
      %vm1009 = vweird.f32 %v1003
      %vm1010 = vmor %vm1008, %vm1009
      %v1011 = vsel %vm1010, %v1003, %v1007
      %v1012 = vand.u32 2147483647, %v1001
      %vm1013 = vcmp.eq.f32.partialorder %v1012, 8.507059e+37
      %v1014 = vand.u32 %v1001, 2147483648
      %v1015 = vor.u32 1.1754944e-38, %v1014
      %v1016 = vsel %vm1013, %v1015, %v1011
      %v1017 = vmul.f32 1.0, %v1016
      %v1018 = vrcp.pop %v1002
      %v1019 = vmul.f32 %v1002, %v1018
      %v1020 = vsub.f32 1.0, %v1019
      %v1021 = vmul.f32 %v1018, %v1020
      %v1022 = vadd.f32 %v1018, %v1021
      %vm1023 = vweird.f32 %v1002
      %vm1024 = vweird.f32 %v1018
      %vm1025 = vmor %vm1023, %vm1024
      %v1026 = vsel %vm1025, %v1018, %v1022
      %v1027 = vand.u32 2147483647, %v1002
      %vm1028 = vcmp.eq.f32.partialorder %v1027, 8.507059e+37
      %v1029 = vand.u32 %v1002, 2147483648
      %v1030 = vor.u32 1.1754944e-38, %v1029
      %v1031 = vsel %vm1028, %v1030, %v1026
      %v1032 = vmul.f32 1.0, %v1031
      %1035 = vrot.lane.b32.xlu0 %v991, 64
      %v1036 = vpop.permute.xlu0 %1035
      %1037 = vrot.lane.b32.xlu0 %v992, 64
      %v1038 = vpop.permute.xlu0 %1037
      %v1041 = vmul.f32 %v1017, %v1036
      %v1042 = vmul.f32 %v1032, %v1038
      %1045 = vrot.lane.b32.xlu0 %v1041, 64
      %v1046 = vpop.permute.xlu0 %1045
      %1047 = vrot.lane.b32.xlu0 %v1042, 64
      %v1048 = vpop.permute.xlu0 %1047
      %v1051 = vsub.f32 %v993, %v1046
      %v1052 = vsub.f32 %v994, %v1048
      %v1053 = vtanh.pop %v1051
      %v1054 = vtanh.pop %v1052
      %1057 = vrot.lane.b32.xlu0 %v894, 96
      %v1058 = vpop.permute.xlu0 %1057
      %1059 = vrot.lane.b32.xlu0 %v895, 96
      %v1060 = vpop.permute.xlu0 %1059
      %v1063 = vmul.f32 %v1017, %v1058
      %v1064 = vmul.f32 %v1032, %v1060
      %v1065 = vsub.f32 1.0, %v1017
      %v1066 = vsub.f32 1.0, %v1032
      %1067 = vrot.lane.b32.xlu0 %v896, 96
      %v1068 = vpop.permute.xlu0 %1067
      %1069 = vrot.lane.b32.xlu0 %v897, 96
      %v1070 = vpop.permute.xlu0 %1069
      %v1073 = vmul.f32 %v1065, %v1068
      %v1074 = vmul.f32 %v1066, %v1070
      %v1075 = vadd.f32 %v1063, %v1073
      %v1076 = vadd.f32 %v1064, %v1074
      %1079 = vrot.lane.b32.xlu0 %v1053, 32
      %v1080 = vpop.permute.xlu0 %1079
      %1081 = vrot.lane.b32.xlu0 %v1054, 32
      %v1082 = vpop.permute.xlu0 %1081
      %v1085 = vsub.f32 %v1075, %v1080
      %v1086 = vsub.f32 %v1076, %v1082
      %1089 = vrot.lane.b32.xlu0 %v1085, 64
      %v1090 = vpop.permute.xlu0 %1089
      %1091 = vrot.lane.b32.xlu0 %v1086, 64
      %v1092 = vpop.permute.xlu0 %1091
      %v1095 = vmul.f32 %v1017, %v1090
      %v1096 = vmul.f32 %v1032, %v1092
      %1099 = vrot.lane.b32.xlu0 %v1095, 32
      %v1100 = vpop.permute.xlu0 %1099
      %1101 = vrot.lane.b32.xlu0 %v1096, 32
      %v1102 = vpop.permute.xlu0 %1101
      %v1105 = vadd.f32 %v1053, %v1100
      %v1106 = vadd.f32 %v1054, %v1102
      %1109 = vrot.lane.b32.xlu0 %v1105, 64
      %v1110 = vpop.permute.xlu0 %1109
      %1111 = vrot.lane.b32.xlu0 %v1106, 64
      %v1112 = vpop.permute.xlu0 %1111
      %v1115 = vsel %vm265, %v1110, 0.0
      %1116 = vadd.xlane.f32.xlu0 %v1115
      %v1117 = vpop.xlane.xlu0 %1116
      %v1118 = vsel %vm265, %v1112, 0.0
      %1119 = vadd.xlane.f32.xlu0 %v1118
      %v1120 = vpop.xlane.xlu0 %1119
      %v1121 = vmul.f32 %v1117, 0.03125
      %v1122 = vmul.f32 %v1120, 0.03125
      %v1123 = vmul.f32 %v1105, %v1105
      %v1124 = vmul.f32 %v1106, %v1106
      %1127 = vrot.lane.b32.xlu0 %v1123, 64
      %v1128 = vpop.permute.xlu0 %1127
      %1129 = vrot.lane.b32.xlu0 %v1124, 64
      %v1130 = vpop.permute.xlu0 %1129
      %v1133 = vsel %vm265, %v1128, 0.0
      %1134 = vadd.xlane.f32.xlu0 %v1133
      %v1135 = vpop.xlane.xlu0 %1134
      %v1136 = vsel %vm265, %v1130, 0.0
      %1137 = vadd.xlane.f32.xlu0 %v1136
      %v1138 = vpop.xlane.xlu0 %1137
      %v1139 = vmul.f32 %v1135, 0.03125
      %v1140 = vmul.f32 %v1138, 0.03125
      %v1141 = vsub.f32 %v1105, %v1121
      %v1142 = vsub.f32 %v1106, %v1122
      %v1143 = vmul.f32 %v1121, %v1121
      %v1144 = vmul.f32 %v1122, %v1122
      %v1145 = vsub.f32 %v1139, %v1143
      %v1146 = vsub.f32 %v1140, %v1144
      %v1147 = vadd.f32 %v1145, 1e-05
      %v1148 = vadd.f32 %v1146, 1e-05
      %v1149 = vrsqrt.pop %v1147
      %v1150 = vmul.f32 %v1149, %v1147
      %v1151 = vmul.f32 %v1150, %v1149
      %v1152 = vmul.f32 0.5, %v1151
      %v1153 = vsub.f32 1.5, %v1152
      %v1154 = vmul.f32 %v1149, %v1153
      %vm1155 = vweird.f32 %v1147
      %vm1156 = vweird.f32 %v1149
      %vm1157 = vmor %vm1155, %vm1156
      %v1158 = vsel %vm1157, %v1149, %v1154
      %v1159 = vrsqrt.pop %v1148
      %v1160 = vmul.f32 %v1159, %v1148
      %v1161 = vmul.f32 %v1160, %v1159
      %v1162 = vmul.f32 0.5, %v1161
      %v1163 = vsub.f32 1.5, %v1162
      %v1164 = vmul.f32 %v1159, %v1163
      %vm1165 = vweird.f32 %v1148
      %vm1166 = vweird.f32 %v1159
      %vm1167 = vmor %vm1165, %vm1166
      %v1168 = vsel %vm1167, %v1159, %v1164
      %v1169 = vmul.f32 %v1141, %v1158
      %v1170 = vmul.f32 %v1142, %v1168
      %v1171 = vmul.f32 %v1169, %v537
      %v1172 = vmul.f32 %v1170, %v537
      %v1173 = vadd.f32 %v1171, %v544
      %v1174 = vadd.f32 %v1172, %v544
      %1176 = vset.pattern.permute.xlu0 0
      %1177 = vperm.xlu0 %1176, %v892
      %v1178 = vpop.permute.xlu0 %1177
      %1181 = vset.pattern.permute.xlu0 0
      %1182 = vperm.xlu0 %1181, %v893
      %v1183 = vpop.permute.xlu0 %1182
      %v1185 = vmul.f32 %v1173, %v1178
      %v1186 = vmul.f32 %v1174, %v1183
      %1189 = vrot.lane.b32.xlu0 %v1185, 64
      %v1190 = vpop.permute.xlu0 %1189
      %1191 = vrot.lane.b32.xlu0 %v1186, 64
      %v1192 = vpop.permute.xlu0 %1191
      %1195 = vst.msk [vmem:[#allocation2 + $0x2] sm:$0xff] %vm265, %v1190
      %1196 = vst.msk [vmem:[#allocation2 + $0xa] sm:$0xff] %vm265, %v1192
      %s1197 = scalar_lea.vmem %s231, 32
      %1198 = vst.msk [vmem:[%s1197] sm:$0xff] %vm265, %v1190
      %1199 = vst.msk [vmem:[%s1197 + $0x8] sm:$0xff] %vm265, %v1192
      %s1200 = scalar_lea.vmem %s224, 48
      %v1201 = vld [vmem:[%s1200] sm:$0xff]
      %v1202 = vld [vmem:[%s1200 + $0x8] sm:$0xff]
      %s1203 = sadd.s32 %s248, 3
      %s1204 = smul.u32 %s1203, 16
      %s1205 = scalar_lea.vmem %s1, %s1204
      %v1206 = vld [vmem:[%s1205] sm:$0xff]
      %v1207 = vld [vmem:[%s1205 + $0x8] sm:$0xff]
      %v1208 = vld [vmem:[#allocation2 + $0x2] sm:$0xff]
      %v1209 = vld [vmem:[#allocation2 + $0xa] sm:$0xff]
      %v1210 = vld [vmem:[#allocation2] sm:$0xff]
      %v1211 = vld [vmem:[#allocation2 + $0x8] sm:$0xff]
      %1214 = vrot.lane.b32.xlu0 %v1210, 32
      %v1215 = vpop.permute.xlu0 %1214
      %1216 = vrot.lane.b32.xlu0 %v1211, 32
      %v1217 = vpop.permute.xlu0 %1216
      %v1220 = vsel %vm265, %v1208, %v1215
      %v1221 = vsel %vm265, %v1209, %v1217
      %v1222 = vld [vmem:[%s2] sm:$0xff]
      %v1223 = vld [vmem:[%s2 + $0x8] sm:$0xff]
      %v1224 = vld [vmem:[%s2 + $0x10] sm:$0xff]
      %v1225 = vld [vmem:[%s2 + $0x18] sm:$0xff]
      %v1226 = vld [vmem:[%s2 + $0x20] sm:$0xff]
      %v1227 = vld [vmem:[%s2 + $0x28] sm:$0xff]
      %v1228 = vld [vmem:[%s2 + $0x30] sm:$0xff]
      %v1229 = vld [vmem:[%s2 + $0x38] sm:$0xff]
      %v1231 = vsel %vm276, %v1220, 0
      %v1234 = vsel %vm276, %v1221, 0
      %1236 = vmatpush.msra.mxu0 0.0
      %1237 = vmatpush.msra.mxu0 0.0
      %1238 = vmatpush.msra.mxu0 0.0
      %1239 = vmatpush.msra.mxu0 0.0
      %1240 = vmatpush.msra.mxu0 0.0
      %1241 = vmatpush.msra.mxu0 0.0
      %1242 = vmatpush.msra.mxu0 0.0
      %1243 = vmatpush.msra.mxu0 0.0
      %1244 = vmatpush.msra.mxu0 %v1229
      %1245 = vmatpush.msra.mxu0 %v1228
      %1246 = vmatpush.msra.mxu0 %v1227
      %1247 = vmatpush.msra.mxu0 %v1226
      %1248 = vmatpush.msra.mxu0 %v1225
      %1249 = vmatpush.msra.mxu0 %v1224
      %1250 = vmatpush.msra.mxu0 %v1223
      %1251 = vmatpush.msra.mxu0 %v1222
      %1252 = vmatmul.f32.gmra.mxu0 %v1231
      %v1253 = vpop.f32.mrf.mxu0
      %v1254 = vadd.f32 0.0, %v1253
      %1255 = vmatmul.f32.gmra.mxu0 %v1234
      %v1256 = vpop.f32.mrf.mxu0
      %v1257 = vadd.f32 0.0, %v1256
      %1258 = vdwg.mxu0
      %1259 = vadd.xlane.f32.xlu0 %v1254
      %v1260 = vpop.xlane.xlu0 %1259
      %1261 = vadd.xlane.f32.xlu0 %v1257
      %v1262 = vpop.xlane.xlu0 %1261
      %v1263 = vmul.f32 %v1260, 0.0078125
      %v1264 = vmul.f32 %v1262, 0.0078125
      %v1265 = vmul.f32 %v1254, %v1254
      %v1266 = vmul.f32 %v1257, %v1257
      %1267 = vadd.xlane.f32.xlu0 %v1265
      %v1268 = vpop.xlane.xlu0 %1267
      %1269 = vadd.xlane.f32.xlu0 %v1266
      %v1270 = vpop.xlane.xlu0 %1269
      %v1271 = vmul.f32 %v1268, 0.0078125
      %v1272 = vmul.f32 %v1270, 0.0078125
      %v1273 = vsub.f32 %v1254, %v1263
      %v1274 = vsub.f32 %v1257, %v1264
      %v1275 = vmul.f32 %v1263, %v1263
      %v1276 = vmul.f32 %v1264, %v1264
      %v1277 = vsub.f32 %v1271, %v1275
      %v1278 = vsub.f32 %v1272, %v1276
      %v1279 = vadd.f32 %v1277, 1e-05
      %v1280 = vadd.f32 %v1278, 1e-05
      %v1281 = vrsqrt.pop %v1279
      %v1282 = vmul.f32 %v1281, %v1279
      %v1283 = vmul.f32 %v1282, %v1281
      %v1284 = vmul.f32 0.5, %v1283
      %v1285 = vsub.f32 1.5, %v1284
      %v1286 = vmul.f32 %v1281, %v1285
      %vm1287 = vweird.f32 %v1279
      %vm1288 = vweird.f32 %v1281
      %vm1289 = vmor %vm1287, %vm1288
      %v1290 = vsel %vm1289, %v1281, %v1286
      %v1291 = vrsqrt.pop %v1280
      %v1292 = vmul.f32 %v1291, %v1280
      %v1293 = vmul.f32 %v1292, %v1291
      %v1294 = vmul.f32 0.5, %v1293
      %v1295 = vsub.f32 1.5, %v1294
      %v1296 = vmul.f32 %v1291, %v1295
      %vm1297 = vweird.f32 %v1280
      %vm1298 = vweird.f32 %v1291
      %vm1299 = vmor %vm1297, %vm1298
      %v1300 = vsel %vm1299, %v1291, %v1296
      %v1301 = vmul.f32 %v1273, %v1290
      %v1302 = vmul.f32 %v1274, %v1300
      %v1303 = vmul.f32 %v1301, %v350
      %v1304 = vmul.f32 %v1302, %v350
      %v1305 = vadd.f32 %v1303, %v353
      %v1306 = vadd.f32 %v1304, %v353
      %v1307 = vadd.f32 %v1201, %v1305
      %v1308 = vadd.f32 %v1202, %v1306
      %v1309 = vxor.u32 %v1307, 2147483648
      %v1310 = vxor.u32 %v1308, 2147483648
      %v1311 = vmul.f32 %v1309, 1.442695
      %v1312 = vpow.pop %v1311
      %v1313 = vmul.f32 %v1310, 1.442695
      %v1314 = vpow.pop %v1313
      %v1315 = vadd.f32 %v1312, 1.0
      %v1316 = vadd.f32 %v1314, 1.0
      %v1317 = vrcp.pop %v1315
      %v1318 = vmul.f32 %v1315, %v1317
      %v1319 = vsub.f32 1.0, %v1318
      %v1320 = vmul.f32 %v1317, %v1319
      %v1321 = vadd.f32 %v1317, %v1320
      %vm1322 = vweird.f32 %v1315
      %vm1323 = vweird.f32 %v1317
      %vm1324 = vmor %vm1322, %vm1323
      %v1325 = vsel %vm1324, %v1317, %v1321
      %v1326 = vand.u32 2147483647, %v1315
      %vm1327 = vcmp.eq.f32.partialorder %v1326, 8.507059e+37
      %v1328 = vand.u32 %v1315, 2147483648
      %v1329 = vor.u32 1.1754944e-38, %v1328
      %v1330 = vsel %vm1327, %v1329, %v1325
      %v1331 = vmul.f32 1.0, %v1330
      %v1332 = vrcp.pop %v1316
      %v1333 = vmul.f32 %v1316, %v1332
      %v1334 = vsub.f32 1.0, %v1333
      %v1335 = vmul.f32 %v1332, %v1334
      %v1336 = vadd.f32 %v1332, %v1335
      %vm1337 = vweird.f32 %v1316
      %vm1338 = vweird.f32 %v1332
      %vm1339 = vmor %vm1337, %vm1338
      %v1340 = vsel %vm1339, %v1332, %v1336
      %v1341 = vand.u32 2147483647, %v1316
      %vm1342 = vcmp.eq.f32.partialorder %v1341, 8.507059e+37
      %v1343 = vand.u32 %v1316, 2147483648
      %v1344 = vor.u32 1.1754944e-38, %v1343
      %v1345 = vsel %vm1342, %v1344, %v1340
      %v1346 = vmul.f32 1.0, %v1345
      %1349 = vrot.lane.b32.xlu0 %v1305, 64
      %v1350 = vpop.permute.xlu0 %1349
      %1351 = vrot.lane.b32.xlu0 %v1306, 64
      %v1352 = vpop.permute.xlu0 %1351
      %v1355 = vmul.f32 %v1331, %v1350
      %v1356 = vmul.f32 %v1346, %v1352
      %1359 = vrot.lane.b32.xlu0 %v1355, 64
      %v1360 = vpop.permute.xlu0 %1359
      %1361 = vrot.lane.b32.xlu0 %v1356, 64
      %v1362 = vpop.permute.xlu0 %1361
      %v1365 = vsub.f32 %v1307, %v1360
      %v1366 = vsub.f32 %v1308, %v1362
      %v1367 = vtanh.pop %v1365
      %v1368 = vtanh.pop %v1366
      %1371 = vrot.lane.b32.xlu0 %v1208, 96
      %v1372 = vpop.permute.xlu0 %1371
      %1373 = vrot.lane.b32.xlu0 %v1209, 96
      %v1374 = vpop.permute.xlu0 %1373
      %v1377 = vmul.f32 %v1331, %v1372
      %v1378 = vmul.f32 %v1346, %v1374
      %v1379 = vsub.f32 1.0, %v1331
      %v1380 = vsub.f32 1.0, %v1346
      %1381 = vrot.lane.b32.xlu0 %v1210, 96
      %v1382 = vpop.permute.xlu0 %1381
      %1383 = vrot.lane.b32.xlu0 %v1211, 96
      %v1384 = vpop.permute.xlu0 %1383
      %v1387 = vmul.f32 %v1379, %v1382
      %v1388 = vmul.f32 %v1380, %v1384
      %v1389 = vadd.f32 %v1377, %v1387
      %v1390 = vadd.f32 %v1378, %v1388
      %1393 = vrot.lane.b32.xlu0 %v1367, 32
      %v1394 = vpop.permute.xlu0 %1393
      %1395 = vrot.lane.b32.xlu0 %v1368, 32
      %v1396 = vpop.permute.xlu0 %1395
      %v1399 = vsub.f32 %v1389, %v1394
      %v1400 = vsub.f32 %v1390, %v1396
      %1403 = vrot.lane.b32.xlu0 %v1399, 64
      %v1404 = vpop.permute.xlu0 %1403
      %1405 = vrot.lane.b32.xlu0 %v1400, 64
      %v1406 = vpop.permute.xlu0 %1405
      %v1409 = vmul.f32 %v1331, %v1404
      %v1410 = vmul.f32 %v1346, %v1406
      %1413 = vrot.lane.b32.xlu0 %v1409, 32
      %v1414 = vpop.permute.xlu0 %1413
      %1415 = vrot.lane.b32.xlu0 %v1410, 32
      %v1416 = vpop.permute.xlu0 %1415
      %v1419 = vadd.f32 %v1367, %v1414
      %v1420 = vadd.f32 %v1368, %v1416
      %1423 = vrot.lane.b32.xlu0 %v1419, 64
      %v1424 = vpop.permute.xlu0 %1423
      %1425 = vrot.lane.b32.xlu0 %v1420, 64
      %v1426 = vpop.permute.xlu0 %1425
      %v1429 = vsel %vm265, %v1424, 0.0
      %1430 = vadd.xlane.f32.xlu0 %v1429
      %v1431 = vpop.xlane.xlu0 %1430
      %v1432 = vsel %vm265, %v1426, 0.0
      %1433 = vadd.xlane.f32.xlu0 %v1432
      %v1434 = vpop.xlane.xlu0 %1433
      %v1435 = vmul.f32 %v1431, 0.03125
      %v1436 = vmul.f32 %v1434, 0.03125
      %v1437 = vmul.f32 %v1419, %v1419
      %v1438 = vmul.f32 %v1420, %v1420
      %1441 = vrot.lane.b32.xlu0 %v1437, 64
      %v1442 = vpop.permute.xlu0 %1441
      %1443 = vrot.lane.b32.xlu0 %v1438, 64
      %v1444 = vpop.permute.xlu0 %1443
      %v1447 = vsel %vm265, %v1442, 0.0
      %1448 = vadd.xlane.f32.xlu0 %v1447
      %v1449 = vpop.xlane.xlu0 %1448
      %v1450 = vsel %vm265, %v1444, 0.0
      %1451 = vadd.xlane.f32.xlu0 %v1450
      %v1452 = vpop.xlane.xlu0 %1451
      %v1453 = vmul.f32 %v1449, 0.03125
      %v1454 = vmul.f32 %v1452, 0.03125
      %v1455 = vsub.f32 %v1419, %v1435
      %v1456 = vsub.f32 %v1420, %v1436
      %v1457 = vmul.f32 %v1435, %v1435
      %v1458 = vmul.f32 %v1436, %v1436
      %v1459 = vsub.f32 %v1453, %v1457
      %v1460 = vsub.f32 %v1454, %v1458
      %v1461 = vadd.f32 %v1459, 1e-05
      %v1462 = vadd.f32 %v1460, 1e-05
      %v1463 = vrsqrt.pop %v1461
      %v1464 = vmul.f32 %v1463, %v1461
      %v1465 = vmul.f32 %v1464, %v1463
      %v1466 = vmul.f32 0.5, %v1465
      %v1467 = vsub.f32 1.5, %v1466
      %v1468 = vmul.f32 %v1463, %v1467
      %vm1469 = vweird.f32 %v1461
      %vm1470 = vweird.f32 %v1463
      %vm1471 = vmor %vm1469, %vm1470
      %v1472 = vsel %vm1471, %v1463, %v1468
      %v1473 = vrsqrt.pop %v1462
      %v1474 = vmul.f32 %v1473, %v1462
      %v1475 = vmul.f32 %v1474, %v1473
      %v1476 = vmul.f32 0.5, %v1475
      %v1477 = vsub.f32 1.5, %v1476
      %v1478 = vmul.f32 %v1473, %v1477
      %vm1479 = vweird.f32 %v1462
      %vm1480 = vweird.f32 %v1473
      %vm1481 = vmor %vm1479, %vm1480
      %v1482 = vsel %vm1481, %v1473, %v1478
      %v1483 = vmul.f32 %v1455, %v1472
      %v1484 = vmul.f32 %v1456, %v1482
      %v1485 = vmul.f32 %v1483, %v537
      %v1486 = vmul.f32 %v1484, %v537
      %v1487 = vadd.f32 %v1485, %v544
      %v1488 = vadd.f32 %v1486, %v544
      %1490 = vset.pattern.permute.xlu0 0
      %1491 = vperm.xlu0 %1490, %v1206
      %v1492 = vpop.permute.xlu0 %1491
      %1495 = vset.pattern.permute.xlu0 0
      %1496 = vperm.xlu0 %1495, %v1207
      %v1497 = vpop.permute.xlu0 %1496
      %v1499 = vmul.f32 %v1487, %v1492
      %v1500 = vmul.f32 %v1488, %v1497
      %1503 = vrot.lane.b32.xlu0 %v1499, 64
      %v1504 = vpop.permute.xlu0 %1503
      %1505 = vrot.lane.b32.xlu0 %v1500, 64
      %v1506 = vpop.permute.xlu0 %1505
      %1509 = vst.msk [vmem:[#allocation2 + $0x2] sm:$0xff] %vm265, %v1504
      %1510 = vst.msk [vmem:[#allocation2 + $0xa] sm:$0xff] %vm265, %v1506
      %s1511 = scalar_lea.vmem %s231, 48
      %1512 = vst.msk [vmem:[%s1511] sm:$0xff] %vm265, %v1504
      %1513 = vst.msk [vmem:[%s1511 + $0x8] sm:$0xff] %vm265, %v1506
      %s1514 = smul.u32 4, %s16
      %p1515 = scmp.lt.s32.totalorder %s1514, 15
      %s1516 = scalar_select %p1515, %s1514, 15
      %s1517 = smul.addr %s1516, 2
      %s1518 = smul.addr %s1517, 8
      %s1519 = scalar_lea.vmem %s5, %s1518
      // Predicated region
      $region45: #{gru2d_layer.1} parent=39 // pred_check
        %p1520 = pneg %p144
      $region46: #{gru2d_layer.1} parent=39 // pred_check_branch
        %1522 = sbr.rel (%p1520) target = $region48
      $region47: #{gru2d_layer.1} parent=39 // pred_region
        %s1523 = smul.u32 4, %s16
      $region48: #{gru2d_layer.1} parent=39 // pred_fallthru
        _
    $region40: #{gru2d_layer.1} parent=5 // pred_fallthru
      _
    %p1524 = scmp.le.s32.totalorder 2, %s11
    // Predicated region
    $region49: #{gru2d_layer.1} parent=5 // pred_check
      %p1525 = pneg %p1524
    $region50: #{gru2d_layer.1} parent=5 // pred_check_branch
      %1527 = sbr.rel (%p1525) target = $region52
    $region51: #{gru2d_layer.1} parent=5 // pred_region
      %s1528 = ssub.s32 %s11, 2
      // Predicated region
      $region53: #{gru2d_layer.1} parent=51 // pred_check
        %p1529 = pneg %p150
      $region54: #{gru2d_layer.1} parent=51 // pred_check_branch
        %1531 = sbr.rel (%p1529) target = $region56
      $region55: #{gru2d_layer.1} parent=51 // pred_region
        %s1532 = smul.u32 4, %s17
        %p1533 = scmp.lt.s32.totalorder %s1532, 15
        %s1534 = scalar_select %p1533, %s1532, 15
        %s1535 = smul.addr %s1534, 2
        %s1536 = smul.addr %s1535, 8
        %s1537 = scalar_lea.vmem %s5, %s1536
      $region56: #{gru2d_layer.1} parent=51 // pred_fallthru
        _
    $region52: #{gru2d_layer.1} parent=5 // pred_fallthru
      _
  $region6: #{gru2d_layer.1} parent=0 // loop_footer
    %s15 = sadd.s32 1, %s11
  $region7: #{gru2d_layer.1} parent=0 // loop_footer_branch
    %10 = sbr.rel target = $region3
  $region8: #{gru2d_layer.1} parent=0 // loop_exit
    _

</llo_original>
